<compile_context>
chip_gen: v7x
topology: tpu7x:2x2x1
jax: 0.10.0
libtpu: 0.0.40
codegen_flags: <defaults>
</compile_context>

<pallas_src>
import jax
import jax.numpy as jnp
from jax.experimental import pallas as pl
from jax.experimental.pallas import tpu as pltpu


def ngram_kernel(x_ref, w1_ref, b1_ref, w2_ref, b2_ref, o_ref,
                 h_scr, m_scr, l_scr):
    # x_ref:  (tb, ctx*emb)   bf16   gathered embeddings for this batch tile
    # w1_ref: (ctx*emb, 128)  bf16   b1_ref: (1, 128)  f32
    # w2_ref: (128, vt)       bf16   b2_ref: (1, vt)   f32   (vocab tile)
    # o_ref:  (tb, vt)        f32    log-probs tile
    # h_scr:  (tb, 128) f32 | m_scr, l_scr: (tb, 1) f32  (persist across grid)
    p = pl.program_id(1)   # 0 = stats pass, 1 = write pass
    j = pl.program_id(2)   # vocab tile index

    # Hidden activations: computed once per batch tile (first grid step).
    @pl.when(jnp.logical_and(p == 0, j == 0))
    def _():
        h = jnp.dot(x_ref[...], w1_ref[...], preferred_element_type=jnp.float32)
        h_scr[...] = jnp.maximum(h + b1_ref[...], 0.0)          # ReLU, f32
        m_scr[...] = jnp.full(m_scr.shape, -jnp.inf, m_scr.dtype)
        l_scr[...] = jnp.zeros(l_scr.shape, l_scr.dtype)

    # Logits for this vocab tile (f32 accumulation on the MXU).
    logits = (jnp.dot(h_scr[...].astype(jnp.bfloat16), w2_ref[...],
                      preferred_element_type=jnp.float32) + b2_ref[...])

    @pl.when(p == 0)
    def _():
        # Online max / sum-of-exp across vocab tiles.
        m_prev = m_scr[...]
        m_new = jnp.maximum(m_prev, jnp.max(logits, axis=-1, keepdims=True))
        l_scr[...] = (l_scr[...] * jnp.exp(m_prev - m_new)
                      + jnp.sum(jnp.exp(logits - m_new), axis=-1, keepdims=True))
        m_scr[...] = m_new

    @pl.when(p == 1)
    def _():
        lse = m_scr[...] + jnp.log(l_scr[...])
        o_ref[...] = logits - lse


def _round_up(x, m):
    return (x + m - 1) // m * m


def ngram_forward(token_ids, emb_table, w1, b1, w2, b2, *,
                  batch_tile=128, vocab_tile=512):
    """Batched NGramLanguageModeler forward.

    token_ids: int32 (B, context_size) (or (context_size,) for one context).
    Returns float32 (B, vocab) log-probs, one row per context.
    """
    if token_ids.ndim == 1:
        token_ids = token_ids[None, :]
    B, ctx = token_ids.shape
    vocab, emb_dim = emb_table.shape
    in_features, hidden = w1.shape
    assert in_features == ctx * emb_dim
    assert w2.shape == (hidden, vocab)
    assert vocab % 128 == 0, "vocab must be a multiple of 128 (lane-dense tiles)"

    vt = min(vocab_tile, vocab)
    assert vt % 128 == 0 and vocab % vt == 0, "vocab tile must divide vocab, %128"

    # bf16 weight storage (halves HBM/VMEM traffic, MXU-native); f32 biases,
    # f32 accumulation everywhere.
    emb_bf = emb_table.astype(jnp.bfloat16)
    w1_bf = w1.astype(jnp.bfloat16)
    w2_bf = w2.astype(jnp.bfloat16)
    b1_f = b1.reshape(1, hidden).astype(jnp.float32)
    b2_f = b2.reshape(1, vocab).astype(jnp.float32)

    # Embedding gather as a cheap XLA gather (B*ctx*emb*2 bytes), NOT an
    # in-kernel one-hot matmul (which would be O(vocab) MXU FLOPs per row).
    x = jnp.take(emb_bf, token_ids.reshape(-1), axis=0).reshape(B, in_features)

    # Batch tiling: v5e/v6e want few fat tiles (serial grid, ~0.35us/step);
    # on v7x the "parallel" batch axis is sharded over 2 TensorCores, so the
    # demo sizes below give n_btiles == 2.
    tb = min(batch_tile, _round_up(B, 8))
    Bp = _round_up(B, tb)
    if Bp != B:
        x = jnp.pad(x, ((0, Bp - B), (0, 0)))
    n_btiles = Bp // tb
    n_vtiles = vocab // vt

    # Honest cost estimate: h once, logits twice (stats pass + write pass);
    # invariant W1/b1 fetched once, vocab-tiled W2/b2 streamed twice/batch tile.
    flops = 2 * Bp * in_features * hidden + 2 * (2 * Bp * hidden * vocab)
    bytes_accessed = (Bp * in_features * 2 + Bp * vocab * 4
                      + w1_bf.size * 2 + b1_f.size * 4
                      + 2 * n_btiles * (w2_bf.size * 2 + b2_f.size * 4))
    cost = pl.CostEstimate(flops=flops,
                           transcendentals=Bp * vocab + Bp * n_vtiles,
                           bytes_accessed=bytes_accessed)

    out = pl.pallas_call(
        ngram_kernel,
        out_shape=jax.ShapeDtypeStruct((Bp, vocab), jnp.float32),
        grid_spec=pltpu.PrefetchScalarGridSpec(
            num_scalar_prefetch=0,
            grid=(n_btiles, 2, n_vtiles),
            in_specs=[
                pl.BlockSpec((tb, in_features), lambda i, p, j: (i, 0)),      # x
                pl.BlockSpec((in_features, hidden), lambda i, p, j: (0, 0)),  # W1
                pl.BlockSpec((1, hidden), lambda i, p, j: (0, 0)),            # b1
                pl.BlockSpec((hidden, vt), lambda i, p, j: (0, j)),           # W2 tile
                pl.BlockSpec((1, vt), lambda i, p, j: (0, j)),                # b2 tile
            ],
            # During the stats pass (p==0) park the output on vocab-block 0 so
            # each real output block is written back to HBM exactly once.
            out_specs=pl.BlockSpec((tb, vt), lambda i, p, j: (i, p * j)),
            scratch_shapes=[
                pltpu.VMEM((tb, hidden), jnp.float32),   # h
                pltpu.VMEM((tb, 1), jnp.float32),        # running max
                pltpu.VMEM((tb, 1), jnp.float32),        # running sum-of-exp
            ],
        ),
        compiler_params=pltpu.CompilerParams(
            dimension_semantics=("parallel", "arbitrary", "arbitrary"),
        ),
        cost_estimate=cost,
    )(x, w1_bf, b1_f, w2_bf, b2_f)

    return out[:B]


if __name__ == "__main__":
    # Small shapes consistent with the module (hidden=128 is fixed by it).
    vocab_size = 512
    embedding_dim = 64
    context_size = 2
    hidden = 128
    in_features = context_size * embedding_dim   # 128
    batch = 256                                   # batched contexts per call

    key = jax.random.PRNGKey(0)
    k_emb, k_w1, k_b1, k_w2, k_b2, k_in = jax.random.split(key, 6)

    # Parameters (weights stored in bf16, biases in f32).
    emb_table = jax.random.normal(
        k_emb, (vocab_size, embedding_dim), jnp.float32).astype(jnp.bfloat16)
    w1 = jax.random.uniform(
        k_w1, (in_features, hidden), jnp.float32, -0.1, 0.1).astype(jnp.bfloat16)
    b1 = jax.random.uniform(k_b1, (hidden,), jnp.float32, -0.1, 0.1)
    w2 = jax.random.uniform(
        k_w2, (hidden, vocab_size), jnp.float32, -0.1, 0.1).astype(jnp.bfloat16)
    b2 = jax.random.uniform(k_b2, (vocab_size,), jnp.float32, -0.1, 0.1)

    # A batch of n-gram contexts: (batch, context_size) token ids.
    token_ids = jax.random.randint(
        k_in, (batch, context_size), 0, vocab_size, jnp.int32)

    log_probs = ngram_forward(token_ids, emb_table, w1, b1, w2, b2,
                              batch_tile=128, vocab_tile=256)
    log_probs = jax.block_until_ready(log_probs)

    # Reference in plain JAX (same bf16 weight storage / f32 accumulation).
    emb_rows = jnp.take(emb_table, token_ids.reshape(-1), axis=0)
    x_ref = emb_rows.reshape(batch, in_features)                        # bf16
    h_ref = jnp.maximum(
        jnp.dot(x_ref, w1, preferred_element_type=jnp.float32) + b1, 0.0)
    logits_ref = jnp.dot(
        h_ref.astype(jnp.bfloat16), w2, preferred_element_type=jnp.float32) + b2
    ref = jax.nn.log_softmax(logits_ref, axis=-1)

    assert log_probs.shape == (batch, vocab_size)
    assert log_probs.dtype == jnp.float32
    # bf16 weights + online log-softmax -> loosened tolerance vs pure-f32.
    assert jnp.allclose(log_probs, ref, atol=2e-2), "mismatch vs reference"
    # Sanity: each row of log-probs exponentiates-and-sums to 1.
    assert jnp.allclose(jnp.sum(jnp.exp(log_probs), axis=-1), 1.0, atol=1e-3)

    print("KERNEL_OK")
</pallas_src>

<mosaic_0001>
module attributes {stable_mosaic.version = 11 : i64} {
  func.func @ngram_kernel(%arg0: i32, %arg1: i32, %arg2: i32, %arg3: memref<128x128xbf16, #tpu.memory_space<vmem>>, %arg4: memref<128x128xbf16, #tpu.memory_space<vmem>>, %arg5: memref<1x128xf32, #tpu.memory_space<vmem>>, %arg6: memref<128x256xbf16, #tpu.memory_space<vmem>>, %arg7: memref<1x256xf32, #tpu.memory_space<vmem>>, %arg8: memref<128x256xf32, #tpu.memory_space<vmem>>, %arg9: memref<128x128xf32, #tpu.memory_space<vmem>>, %arg10: memref<128x1xf32, #tpu.memory_space<vmem>>, %arg11: memref<128x1xf32, #tpu.memory_space<vmem>>) attributes {dimension_semantics = [#tpu.dimension_semantics<parallel>, #tpu.dimension_semantics<arbitrary>, #tpu.dimension_semantics<arbitrary>], iteration_bounds = array<i64: 2, 2, 2>, scalar_prefetch = 0 : i64, scratch_operands = 3 : i64, tpu.core_type = #tpu.core_type<tc>, window_params = [{transform_indices = @transform_0, window_bounds = array<i64: 128, 128>}, {pipeline_mode = #tpu.pipeline_mode<synchronous>, transform_indices = @transform_1, window_bounds = array<i64: 128, 128>}, {pipeline_mode = #tpu.pipeline_mode<synchronous>, transform_indices = @transform_2, window_bounds = array<i64: 1, 128>}, {transform_indices = @transform_3, window_bounds = array<i64: 128, 256>}, {transform_indices = @transform_4, window_bounds = array<i64: 1, 256>}, {transform_indices = @transform_5, window_bounds = array<i64: 128, 256>}]} {
    %c0_i32 = arith.constant 0 : i32
    %0 = arith.cmpi eq, %arg1, %c0_i32 : i32
    %c0_i32_0 = arith.constant 0 : i32
    %1 = arith.cmpi eq, %arg2, %c0_i32_0 : i32
    %2 = arith.andi %0, %1 : i1
    %3 = arith.extui %2 : i1 to i32
    %c0_i32_1 = arith.constant 0 : i32
    %4 = arith.cmpi ne, %3, %c0_i32_1 : i32
    scf.if %4 {
      %c0_10 = arith.constant 0 : index
      %c0_11 = arith.constant 0 : index
      %18 = vector.load %arg3[%c0_10, %c0_11] : memref<128x128xbf16, #tpu.memory_space<vmem>>, vector<128x128xbf16>
      %c0_12 = arith.constant 0 : index
      %c0_13 = arith.constant 0 : index
      %19 = vector.load %arg4[%c0_12, %c0_13] : memref<128x128xbf16, #tpu.memory_space<vmem>>, vector<128x128xbf16>
      %cst_14 = arith.constant dense<0.000000e+00> : vector<128x128xf32>
      %20 = tpu.matmul %18, %19, %cst_14 {dimension_numbers = #tpu.dot_dimension_numbers<[1], [0], [0], [1], [0, 0, 1, 1], [], []>} : vector<128x128xbf16>, vector<128x128xbf16>, vector<128x128xf32> -> vector<128x128xf32>
      %c0_15 = arith.constant 0 : index
      %c0_16 = arith.constant 0 : index
      %21 = vector.load %arg5[%c0_15, %c0_16] : memref<1x128xf32, #tpu.memory_space<vmem>>, vector<1x128xf32>
      %22 = vector.broadcast %21 : vector<1x128xf32> to vector<128x128xf32>
      %23 = arith.addf %20, %22 : vector<128x128xf32>
      %cst_17 = arith.constant 0.000000e+00 : f32
      %24 = vector.broadcast %cst_17 : f32 to vector<128x128xf32>
      %25 = arith.maximumf %23, %24 : vector<128x128xf32>
      %c0_18 = arith.constant 0 : index
      %c0_19 = arith.constant 0 : index
      %26 = vector.load %arg9[%c0_18, %c0_19] : memref<128x128xf32, #tpu.memory_space<vmem>>, vector<128x128xf32>
      tpu.vector_store %arg9[%c0_18, %c0_19], %25 {strides = array<i32>} : memref<128x128xf32, #tpu.memory_space<vmem>>, vector<128x128xf32>,
      %cst_20 = arith.constant 0xFF800000 : f32
      %27 = vector.broadcast %cst_20 : f32 to vector<128x1xf32>
      %c0_21 = arith.constant 0 : index
      %c0_22 = arith.constant 0 : index
      %28 = vector.load %arg10[%c0_21, %c0_22] : memref<128x1xf32, #tpu.memory_space<vmem>>, vector<128x1xf32>
      tpu.vector_store %arg10[%c0_21, %c0_22], %27 {strides = array<i32>} : memref<128x1xf32, #tpu.memory_space<vmem>>, vector<128x1xf32>,
      %cst_23 = arith.constant 0.000000e+00 : f32
      %29 = vector.broadcast %cst_23 : f32 to vector<128x1xf32>
      %c0_24 = arith.constant 0 : index
      %c0_25 = arith.constant 0 : index
      %30 = vector.load %arg11[%c0_24, %c0_25] : memref<128x1xf32, #tpu.memory_space<vmem>>, vector<128x1xf32>
      tpu.vector_store %arg11[%c0_24, %c0_25], %29 {strides = array<i32>} : memref<128x1xf32, #tpu.memory_space<vmem>>, vector<128x1xf32>,
    } else {
    }
    %c0 = arith.constant 0 : index
    %c0_2 = arith.constant 0 : index
    %5 = vector.load %arg9[%c0, %c0_2] : memref<128x128xf32, #tpu.memory_space<vmem>>, vector<128x128xf32>
    %6 = arith.truncf %5 : vector<128x128xf32> to vector<128x128xbf16>
    %c0_3 = arith.constant 0 : index
    %c0_4 = arith.constant 0 : index
    %7 = vector.load %arg6[%c0_3, %c0_4] : memref<128x256xbf16, #tpu.memory_space<vmem>>, vector<128x256xbf16>
    %cst = arith.constant dense<0.000000e+00> : vector<128x256xf32>
    %8 = tpu.matmul %6, %7, %cst {dimension_numbers = #tpu.dot_dimension_numbers<[1], [0], [0], [1], [0, 0, 1, 1], [], []>} : vector<128x128xbf16>, vector<128x256xbf16>, vector<128x256xf32> -> vector<128x256xf32>
    %c0_5 = arith.constant 0 : index
    %c0_6 = arith.constant 0 : index
    %9 = vector.load %arg7[%c0_5, %c0_6] : memref<1x256xf32, #tpu.memory_space<vmem>>, vector<1x256xf32>
    %10 = vector.broadcast %9 : vector<1x256xf32> to vector<128x256xf32>
    %11 = arith.addf %8, %10 : vector<128x256xf32>
    %c0_i32_7 = arith.constant 0 : i32
    %12 = arith.cmpi eq, %arg1, %c0_i32_7 : i32
    %13 = arith.extui %12 : i1 to i32
    %c0_i32_8 = arith.constant 0 : i32
    %14 = arith.cmpi ne, %13, %c0_i32_8 : i32
    scf.if %14 {
      %c0_10 = arith.constant 0 : index
      %c0_11 = arith.constant 0 : index
      %18 = vector.load %arg10[%c0_10, %c0_11] : memref<128x1xf32, #tpu.memory_space<vmem>>, vector<128x1xf32>
      %cst_12 = arith.constant dense<0xFF800000> : vector<128xf32>
      %19 = vector.multi_reduction <maximumf>, %11, %cst_12 [1] : vector<128x256xf32> to vector<128xf32>
      %20 = vector.shape_cast %19 : vector<128xf32> to vector<128x1xf32>
      %21 = arith.maximumf %18, %20 : vector<128x1xf32>
      %c0_13 = arith.constant 0 : index
      %c0_14 = arith.constant 0 : index
      %22 = vector.load %arg11[%c0_13, %c0_14] : memref<128x1xf32, #tpu.memory_space<vmem>>, vector<128x1xf32>
      %23 = arith.subf %18, %21 : vector<128x1xf32>
      %24 = math.exp %23 : vector<128x1xf32>
      %25 = arith.mulf %22, %24 : vector<128x1xf32>
      %26 = vector.broadcast %21 : vector<128x1xf32> to vector<128x256xf32>
      %27 = arith.subf %11, %26 : vector<128x256xf32>
      %28 = math.exp %27 : vector<128x256xf32>
      %cst_15 = arith.constant dense<0.000000e+00> : vector<128xf32>
      %29 = vector.multi_reduction <add>, %28, %cst_15 [1] : vector<128x256xf32> to vector<128xf32>
      %30 = vector.shape_cast %29 : vector<128xf32> to vector<128x1xf32>
      %31 = arith.addf %25, %30 : vector<128x1xf32>
      %c0_16 = arith.constant 0 : index
      %c0_17 = arith.constant 0 : index
      %32 = vector.load %arg11[%c0_16, %c0_17] : memref<128x1xf32, #tpu.memory_space<vmem>>, vector<128x1xf32>
      tpu.vector_store %arg11[%c0_16, %c0_17], %31 {strides = array<i32>} : memref<128x1xf32, #tpu.memory_space<vmem>>, vector<128x1xf32>,
      %c0_18 = arith.constant 0 : index
      %c0_19 = arith.constant 0 : index
      %33 = vector.load %arg10[%c0_18, %c0_19] : memref<128x1xf32, #tpu.memory_space<vmem>>, vector<128x1xf32>
      tpu.vector_store %arg10[%c0_18, %c0_19], %21 {strides = array<i32>} : memref<128x1xf32, #tpu.memory_space<vmem>>, vector<128x1xf32>,
    } else {
    }
    %c1_i32 = arith.constant 1 : i32
    %15 = arith.cmpi eq, %arg1, %c1_i32 : i32
    %16 = arith.extui %15 : i1 to i32
    %c0_i32_9 = arith.constant 0 : i32
    %17 = arith.cmpi ne, %16, %c0_i32_9 : i32
    scf.if %17 {
      %c0_10 = arith.constant 0 : index
      %c0_11 = arith.constant 0 : index
      %18 = vector.load %arg10[%c0_10, %c0_11] : memref<128x1xf32, #tpu.memory_space<vmem>>, vector<128x1xf32>
      %c0_12 = arith.constant 0 : index
      %c0_13 = arith.constant 0 : index
      %19 = vector.load %arg11[%c0_12, %c0_13] : memref<128x1xf32, #tpu.memory_space<vmem>>, vector<128x1xf32>
      %20 = math.log %19 : vector<128x1xf32>
      %21 = arith.addf %18, %20 : vector<128x1xf32>
      %22 = vector.broadcast %21 : vector<128x1xf32> to vector<128x256xf32>
      %23 = arith.subf %11, %22 : vector<128x256xf32>
      %c0_14 = arith.constant 0 : index
      %c0_15 = arith.constant 0 : index
      %24 = vector.load %arg8[%c0_14, %c0_15] : memref<128x256xf32, #tpu.memory_space<vmem>>, vector<128x256xf32>
      tpu.vector_store %arg8[%c0_14, %c0_15], %23 {strides = array<i32>} : memref<128x256xf32, #tpu.memory_space<vmem>>, vector<128x256xf32>,
    } else {
    }
    return
  }
  func.func @transform_0(%arg0: i32, %arg1: i32, %arg2: i32) -> (i32, i32) {
    %c0_i32 = arith.constant 0 : i32
    %c0_i32_0 = arith.constant 0 : i32
    return %arg0, %c0_i32 : i32, i32
  }
  func.func @transform_1(%arg0: i32, %arg1: i32, %arg2: i32) -> (i32, i32) {
    %c0_i32 = arith.constant 0 : i32
    %c0_i32_0 = arith.constant 0 : i32
    %c0_i32_1 = arith.constant 0 : i32
    return %c0_i32, %c0_i32_0 : i32, i32
  }
  func.func @transform_2(%arg0: i32, %arg1: i32, %arg2: i32) -> (i32, i32) {
    %c0_i32 = arith.constant 0 : i32
    %c0_i32_0 = arith.constant 0 : i32
    %c0_i32_1 = arith.constant 0 : i32
    return %c0_i32, %c0_i32_0 : i32, i32
  }
  func.func @transform_3(%arg0: i32, %arg1: i32, %arg2: i32) -> (i32, i32) {
    %c0_i32 = arith.constant 0 : i32
    %c0_i32_0 = arith.constant 0 : i32
    return %c0_i32, %arg2 : i32, i32
  }
  func.func @transform_4(%arg0: i32, %arg1: i32, %arg2: i32) -> (i32, i32) {
    %c0_i32 = arith.constant 0 : i32
    %c0_i32_0 = arith.constant 0 : i32
    return %c0_i32, %arg2 : i32, i32
  }
  func.func @transform_5(%arg0: i32, %arg1: i32, %arg2: i32) -> (i32, i32) {
    %0 = arith.muli %arg1, %arg2 : i32
    %c0_i32 = arith.constant 0 : i32
    return %arg0, %0 : i32, i32
  }
}

</mosaic_0001>

<llo_original>
// kernel: tpu_custom_call.1
$region0: #{tpu_custom_call.1}
  #allocation0 [shape = 'u32[]', space=smem, size = 0x4, offset = 0x4, fixed_abs, tag = 'smem constant byte address 0x4 - core index']
  #allocation1 [shape = 'u32[144,128]{1,0:T(1,128)}', space=vmem, size = 0x12000, scoped, tag = 'internal scratch']
  #allocation2 [shape = 'f32[128,128]{1,0:T(8,128)}', space=vmem, size = 0x10000, scoped, tag = 'scratch operand']
  #allocation3 [shape = 'f32[128,1]{1,0:T(8,128)}', space=vmem, size = 0x10000, scoped, tag = 'scratch operand']
  #allocation4 [shape = 'f32[128,1]{1,0:T(8,128)}', space=vmem, size = 0x10000, scoped, tag = 'scratch operand']
  %s0 = inlined_call_operand.hbm [shape: bf16[256,128], index: 0, kind: input, shape index: {}]
  %s1 = inlined_call_operand.hbm [shape: bf16[128,128], index: 1, kind: input, shape index: {}]
  %s2 = inlined_call_operand.vmem [shape: f32[1,128], index: 2, kind: input, shape index: {}]
  %s3 = inlined_call_operand.hbm [shape: bf16[128,512], index: 3, kind: input, shape index: {}]
  %s4 = inlined_call_operand.vmem [shape: f32[1,512], index: 4, kind: input, shape index: {}]
  %s5 = inlined_call_operand.hbm [shape: f32[256,512], index: 5, kind: output, shape index: {}]
  %s6 = sld [smem:[#allocation0]]
  $region77: #{tpu_custom_call.1} parent=0
    _
  %s8 = ssub.s32 1, %s6
  %s9 = scalar_select 0, %s8, %s6
  $region1: #{tpu_custom_call.1} parent=0
    #allocation5 [shape = 'u8[65536]{0}', space=vmem, size = 0x10000, scoped, tag = 'input window, operand 0']
    #allocation6 [shape = 's32[2]{0}', space=sflag, size = 0x8, scoped, tag = 'scoped memory for tpu_custom_call.1']
    #allocation7 [shape = 's32[2]{0}', space=sflag, size = 0x8, scoped, tag = 'scoped memory for tpu_custom_call.1']
    #allocation8 [shape = 'u8[32768]{0}', space=vmem, size = 0x8000, scoped, tag = 'input window, operand 1, single buffered']
    #allocation9 [shape = 's32[1]{0}', space=sflag, size = 0x4, scoped, tag = 'scoped memory for tpu_custom_call.1']
    #allocation10 [shape = 'u8[131072]{0}', space=vmem, size = 0x20000, scoped, tag = 'input window, operand 3']
    #allocation11 [shape = 'u8[262144]{0}', space=vmem, size = 0x40000, scoped, tag = 'output window, operand 0']
    %10 = vsyncpa [#allocation6], 0
    %s11 = scalar_lea.sflag [#allocation6], 1
    %12 = vsyncpa %s11, 0
    %13 = vsyncpa [#allocation9], 0
    %14 = vsyncpa [#allocation7], 0
    %s15 = scalar_lea.sflag [#allocation7], 1
    %16 = vsyncpa %s15, 0
    loop: start=0, step=1, limit=10
    $region2: #{tpu_custom_call.1} parent=1 // loop_pre_header
      _
    $region3: #{tpu_custom_call.1} parent=1 // loop_header
      %s18 = sphi 0, %s22
      %p19 = scmp.ge.s32.totalorder %s18, 10
      %s25 = sphi 0, %s44
      %s26 = sphi 0, %s40
      %s27 = sphi 0, %s36
      %s28 = sphi 0, %s25
      %s29 = sphi 0, %s26
      %s30 = sphi 0, %s27
      %s31 = sphi 0, %s28
      %s32 = sphi 0, %s29
      %s33 = sphi 0, %s30
      %s47 = sphi 0, %s49
      %s50 = sphi 0, %s47
      %s51 = sphi 0, %s50
      %s67 = sphi 0, %s51
      %s71 = sphi 0, %s71
      %s73 = sphi 0, %s71
      %s74 = sphi 0, %s73
      %s88 = sphi 0, %s74
      %s92 = sphi 0, %s92
      %s94 = sphi 0, %s92
      %s95 = sphi 0, %s94
      %s109 = sphi 0, %s95
      %s115 = sphi 0, %s117
      %s118 = sphi 0, %s115
      %s119 = sphi 0, %s118
      %s135 = sphi 0, %s119
      %s141 = sphi 0, %s143
      %s144 = sphi 0, %s141
      %s145 = sphi 0, %s144
      %s161 = sphi 0, %s145
      %s171 = sphi 0, %s173
      %s174 = sphi 0, %s171
      %s175 = sphi 0, %s174
      %s191 = sphi 0, %s175
    $region4: #{tpu_custom_call.1} parent=1 // loop_header_branch
      %21 = sbr.rel (%p19) target = $region8
    $region5: #{tpu_custom_call.1} parent=1 // loop_body
      %s23 = ssub.s32 %s18, 1
      %s24 = ssub.s32 %s18, 2
      %s34 = sadd.s32 1, %s27
      %p35 = scmp.ge.s32.totalorder %s34, 2
      %s36 = scalar_select %p35, 0, %s34
      %s37 = sadd.s32 1, %s26
      %s38 = scalar_select %p35, %s37, %s26
      %p39 = scmp.ge.s32.totalorder %s38, 2
      %s40 = scalar_select %p39, 0, %s38
      %s41 = sadd.s32 1, %s25
      %s42 = scalar_select %p39, %s41, %s25
      %p43 = scmp.ge.s32.totalorder %s42, 2
      %s44 = scalar_select %p43, 0, %s42
      %s45 = ssub.s32 %s25, %s44
      %p46 = scmp.eq.s32.totalorder %s45, 0
      %s48 = sadd.s32 %s47, 1
      %s49 = scalar_select %p46, %s47, %s48
      %p52 = pneg %p46
      %p53 = scmp.eq.s32.totalorder %s18, 7
      %p54 = por %p52, %p53
      %p55 = scmp.ne.s32.totalorder %s47, %s50
      %p56 = scmp.eq.s32.totalorder %s18, 0
      %p57 = por %p55, %p56
      %p58 = scmp.ne.s32.totalorder %s47, %s50
      %p59 = scmp.eq.s32.totalorder %s23, 7
      %p60 = por %p58, %p59
      %p61 = scmp.ne.s32.totalorder %s50, %s51
      %p62 = scmp.eq.s32.totalorder %s23, 0
      %p63 = por %p61, %p62
      %p64 = scmp.ne.s32.totalorder %s50, %s51
      %p65 = scmp.eq.s32.totalorder %s24, 7
      %p66 = por %p64, %p65
      %p68 = scmp.ne.s32.totalorder %s51, %s67
      %p69 = scmp.eq.s32.totalorder %s24, 0
      %p70 = por %p68, %p69
      %s72 = sadd.s32 %s71, 1
      %p75 = scmp.eq.s32.totalorder %s18, 7
      %p76 = scmp.ne.s32.totalorder %s71, %s73
      %p77 = scmp.eq.s32.totalorder %s18, 0
      %p78 = por %p76, %p77
      %p79 = scmp.ne.s32.totalorder %s71, %s73
      %p80 = scmp.eq.s32.totalorder %s23, 7
      %p81 = por %p79, %p80
      %p82 = scmp.ne.s32.totalorder %s73, %s74
      %p83 = scmp.eq.s32.totalorder %s23, 0
      %p84 = por %p82, %p83
      %p85 = scmp.ne.s32.totalorder %s73, %s74
      %p86 = scmp.eq.s32.totalorder %s24, 7
      %p87 = por %p85, %p86
      %p89 = scmp.ne.s32.totalorder %s74, %s88
      %p90 = scmp.eq.s32.totalorder %s24, 0
      %p91 = por %p89, %p90
      %s93 = sadd.s32 %s92, 1
      %p96 = scmp.eq.s32.totalorder %s18, 7
      %p97 = scmp.ne.s32.totalorder %s92, %s94
      %p98 = scmp.eq.s32.totalorder %s18, 0
      %p99 = por %p97, %p98
      %p100 = scmp.ne.s32.totalorder %s92, %s94
      %p101 = scmp.eq.s32.totalorder %s23, 7
      %p102 = por %p100, %p101
      %p103 = scmp.ne.s32.totalorder %s94, %s95
      %p104 = scmp.eq.s32.totalorder %s23, 0
      %p105 = por %p103, %p104
      %p106 = scmp.ne.s32.totalorder %s94, %s95
      %p107 = scmp.eq.s32.totalorder %s24, 7
      %p108 = por %p106, %p107
      %p110 = scmp.ne.s32.totalorder %s95, %s109
      %p111 = scmp.eq.s32.totalorder %s24, 0
      %p112 = por %p110, %p111
      %s113 = ssub.s32 %s27, %s36
      %p114 = scmp.eq.s32.totalorder %s113, 0
      %s116 = sadd.s32 %s115, 1
      %s117 = scalar_select %p114, %s115, %s116
      %p120 = pneg %p114
      %p121 = scmp.eq.s32.totalorder %s18, 7
      %p122 = por %p120, %p121
      %p123 = scmp.ne.s32.totalorder %s115, %s118
      %p124 = scmp.eq.s32.totalorder %s18, 0
      %p125 = por %p123, %p124
      %p126 = scmp.ne.s32.totalorder %s115, %s118
      %p127 = scmp.eq.s32.totalorder %s23, 7
      %p128 = por %p126, %p127
      %p129 = scmp.ne.s32.totalorder %s118, %s119
      %p130 = scmp.eq.s32.totalorder %s23, 0
      %p131 = por %p129, %p130
      %p132 = scmp.ne.s32.totalorder %s118, %s119
      %p133 = scmp.eq.s32.totalorder %s24, 7
      %p134 = por %p132, %p133
      %p136 = scmp.ne.s32.totalorder %s119, %s135
      %p137 = scmp.eq.s32.totalorder %s24, 0
      %p138 = por %p136, %p137
      %s139 = ssub.s32 %s27, %s36
      %p140 = scmp.eq.s32.totalorder %s139, 0
      %s142 = sadd.s32 %s141, 1
      %s143 = scalar_select %p140, %s141, %s142
      %p146 = pneg %p140
      %p147 = scmp.eq.s32.totalorder %s18, 7
      %p148 = por %p146, %p147
      %p149 = scmp.ne.s32.totalorder %s141, %s144
      %p150 = scmp.eq.s32.totalorder %s18, 0
      %p151 = por %p149, %p150
      %p152 = scmp.ne.s32.totalorder %s141, %s144
      %p153 = scmp.eq.s32.totalorder %s23, 7
      %p154 = por %p152, %p153
      %p155 = scmp.ne.s32.totalorder %s144, %s145
      %p156 = scmp.eq.s32.totalorder %s23, 0
      %p157 = por %p155, %p156
      %p158 = scmp.ne.s32.totalorder %s144, %s145
      %p159 = scmp.eq.s32.totalorder %s24, 7
      %p160 = por %p158, %p159
      %p162 = scmp.ne.s32.totalorder %s145, %s161
      %p163 = scmp.eq.s32.totalorder %s24, 0
      %p164 = por %p162, %p163
      %s165 = smul.u32 %s26, %s27
      %s166 = smul.u32 %s40, %s36
      %s167 = ssub.s32 %s25, %s44
      %s168 = ssub.s32 %s165, %s166
      %s169 = sor.u32 %s167, %s168
      %p170 = scmp.eq.s32.totalorder %s169, 0
      %s172 = sadd.s32 %s171, 1
      %s173 = scalar_select %p170, %s171, %s172
      %p176 = pneg %p170
      %p177 = scmp.eq.s32.totalorder %s18, 7
      %p178 = por %p176, %p177
      %p179 = scmp.ne.s32.totalorder %s171, %s174
      %p180 = scmp.eq.s32.totalorder %s18, 0
      %p181 = por %p179, %p180
      %p182 = scmp.ne.s32.totalorder %s171, %s174
      %p183 = scmp.eq.s32.totalorder %s23, 7
      %p184 = por %p182, %p183
      %p185 = scmp.ne.s32.totalorder %s174, %s175
      %p186 = scmp.eq.s32.totalorder %s23, 0
      %p187 = por %p185, %p186
      %p188 = scmp.ne.s32.totalorder %s174, %s175
      %p189 = scmp.eq.s32.totalorder %s24, 7
      %p190 = por %p188, %p189
      %p192 = scmp.ne.s32.totalorder %s175, %s191
      %p193 = scmp.eq.s32.totalorder %s24, 0
      %p194 = por %p192, %p193
      %p195 = scmp.le.s32.totalorder 1, %s18
      %p196 = scmp.lt.s32.totalorder %s18, 9
      %p197 = pnand %p195, %p196
      %p198 = pneg %p197
      // Predicated region
      $region9: #{tpu_custom_call.1} parent=5 // pred_check
        _
      $region10: #{tpu_custom_call.1} parent=5 // pred_check_branch
        %200 = sbr.rel (%p197) target = $region12
      $region11: #{tpu_custom_call.1} parent=5 // pred_region
        %s201 = ssub.s32 %s18, 1
        // Predicated region
        $region13: #{tpu_custom_call.1} parent=11 // pred_check
          %p202 = pneg %p84
        $region14: #{tpu_custom_call.1} parent=11 // pred_check_branch
          %204 = sbr.rel (%p202) target = $region16
        $region15: #{tpu_custom_call.1} parent=11 // pred_region
          %s206 = ssub.s32 1024, 1024
          %207 = vsyncadd [#allocation9], %s206
          %s208 = sshll.u32 [#allocation8], 4
          %s209 = int_to_ptr.vmem [resolvable:$true] %s208
          %214 = dma.hbm_to_vmem [thread:$0]  %s1, 1024, %s209, [#allocation9], 64, 64, 4
        $region16: #{tpu_custom_call.1} parent=11 // pred_fallthru
          _
        // Predicated region
        $region17: #{tpu_custom_call.1} parent=11 // pred_check
          %p215 = pneg %p105
        $region18: #{tpu_custom_call.1} parent=11 // pred_check_branch
          %217 = sbr.rel (%p215) target = $region20
        $region19: #{tpu_custom_call.1} parent=11 // pred_region
          _
        $region20: #{tpu_custom_call.1} parent=11 // pred_fallthru
          _
      $region12: #{tpu_custom_call.1} parent=5 // pred_fallthru
        _
      %p218 = scmp.lt.s32.totalorder %s18, 8
      // Predicated region
      $region21: #{tpu_custom_call.1} parent=5 // pred_check
        %p219 = pneg %p218
      $region22: #{tpu_custom_call.1} parent=5 // pred_check_branch
        %221 = sbr.rel (%p219) target = $region24
      $region23: #{tpu_custom_call.1} parent=5 // pred_region
        // Predicated region
        $region25: #{tpu_custom_call.1} parent=23 // pred_check
          %p222 = pneg %p57
        $region26: #{tpu_custom_call.1} parent=23 // pred_check_branch
          %224 = sbr.rel (%p222) target = $region28
        $region27: #{tpu_custom_call.1} parent=23 // pred_region
          %s225 = sand.u32 %s18, 1
          %s226 = scalar_lea.sflag [#allocation6], %s225
          %s227 = sand.u32 %s47, 1
          %s228 = smul.addr %s227, 64
          %s229 = scalar_lea.vmem [#allocation5], %s228
          %s230 = smul.u32 16, %s25
          %s232 = ssub.s32 1024, 1024
          %233 = vsyncadd %s226, %s232
          %s234 = smul.addr %s230, 64
          %s235 = scalar_lea.hbm %s0, %s234
          %s236 = sshll.u32 %s229, 4
          %s237 = int_to_ptr.vmem [resolvable:$true] %s236
          %242 = dma.hbm_to_vmem [thread:$0]  %s235, 1024, %s237, %s226, 64, 64, 4
        $region28: #{tpu_custom_call.1} parent=23 // pred_fallthru
          _
        // Predicated region
        $region29: #{tpu_custom_call.1} parent=23 // pred_check
          %p243 = pneg %p125
        $region30: #{tpu_custom_call.1} parent=23 // pred_check_branch
          %245 = sbr.rel (%p243) target = $region32
        $region31: #{tpu_custom_call.1} parent=23 // pred_region
          %s246 = sand.u32 %s18, 1
          %s247 = scalar_lea.sflag [#allocation6], %s246
          %s248 = sand.u32 %s115, 1
          %s249 = smul.addr %s248, 128
          %s250 = scalar_lea.vmem [#allocation10], %s249
          %s251 = smul.u32 2, %s27
          %s253 = ssub.s32 2048, 2048
          %254 = vsyncadd %s247, %s253
          %s255 = smul.addr %s251, 64
          %s256 = scalar_lea.hbm %s3, %s255
          %s257 = sshll.u32 %s250, 4
          %s258 = int_to_ptr.vmem [resolvable:$true] %s257
          %263 = dma.hbm_to_vmem [thread:$0]  %s256, 2048, %s258, %s247, 256, 128, 8
        $region32: #{tpu_custom_call.1} parent=23 // pred_fallthru
          _
        // Predicated region
        $region33: #{tpu_custom_call.1} parent=23 // pred_check
          %p264 = pneg %p151
        $region34: #{tpu_custom_call.1} parent=23 // pred_check_branch
          %266 = sbr.rel (%p264) target = $region36
        $region35: #{tpu_custom_call.1} parent=23 // pred_region
          %s267 = smul.u32 2, %s27
          %p268 = scmp.lt.s32.totalorder %s267, 3
          %s269 = scalar_select %p268, %s267, 3
          %s270 = scalar_lea.vmem %s4, %s269
          %s271 = smul.u32 2, %s27
        $region36: #{tpu_custom_call.1} parent=23 // pred_fallthru
          _
      $region24: #{tpu_custom_call.1} parent=5 // pred_fallthru
        _
      %p272 = scmp.le.s32.totalorder 1, %s18
      %p273 = scmp.lt.s32.totalorder %s18, 9
      %p274 = pnand %p272, %p273
      %p275 = pneg %p274
      // Predicated region
      $region37: #{tpu_custom_call.1} parent=5 // pred_check
        _
      $region38: #{tpu_custom_call.1} parent=5 // pred_check_branch
        %277 = sbr.rel (%p274) target = $region40
      $region39: #{tpu_custom_call.1} parent=5 // pred_region
        %s278 = ssub.s32 %s18, 1
        %s279 = sand.u32 %s23, 1
        %s280 = scalar_lea.sflag [#allocation6], %s279
        %s281 = sand.u32 %s50, 1
        %s282 = smul.addr %s281, 64
        %s283 = scalar_lea.vmem [#allocation5], %s282
        // Predicated region
        $region41: #{tpu_custom_call.1} parent=39 // pred_check
          %p284 = pneg %p63
        $region42: #{tpu_custom_call.1} parent=39 // pred_check_branch
          %286 = sbr.rel (%p284) target = $region44
        $region43: #{tpu_custom_call.1} parent=39 // pred_region
          %287 = dma.done %s280, 1024
        $region44: #{tpu_custom_call.1} parent=39 // pred_fallthru
          _
        // Predicated region
        $region45: #{tpu_custom_call.1} parent=39 // pred_check
          %p288 = pneg %p84
        $region46: #{tpu_custom_call.1} parent=39 // pred_check_branch
          %290 = sbr.rel (%p288) target = $region48
        $region47: #{tpu_custom_call.1} parent=39 // pred_region
          %291 = dma.done [#allocation9], 1024
        $region48: #{tpu_custom_call.1} parent=39 // pred_fallthru
          _
        %s292 = sand.u32 %s23, 1
        %s293 = scalar_lea.sflag [#allocation6], %s292
        %s294 = sand.u32 %s118, 1
        %s295 = smul.addr %s294, 128
        %s296 = scalar_lea.vmem [#allocation10], %s295
        // Predicated region
        $region49: #{tpu_custom_call.1} parent=39 // pred_check
          %p297 = pneg %p131
        $region50: #{tpu_custom_call.1} parent=39 // pred_check_branch
          %299 = sbr.rel (%p297) target = $region52
        $region51: #{tpu_custom_call.1} parent=39 // pred_region
          %300 = dma.done %s293, 2048
        $region52: #{tpu_custom_call.1} parent=39 // pred_fallthru
          _
        %s301 = sand.u32 %s23, 1
        %s302 = scalar_lea.sflag [#allocation6], %s301
        %s303 = sand.u32 %s50, 1
        %s304 = smul.addr %s303, 64
        %s305 = scalar_lea.vmem [#allocation5], %s304
        %p306 = pneg %p63
        %p307 = pneg %p60
        %p308 = pneg %p84
        %p309 = pneg %p81
        %p310 = pneg %p105
        %p311 = pneg %p102
        %s312 = sand.u32 %s23, 1
        %s313 = scalar_lea.sflag [#allocation6], %s312
        %s314 = sand.u32 %s118, 1
        %s315 = smul.addr %s314, 128
        %s316 = scalar_lea.vmem [#allocation10], %s315
        %p317 = pneg %p131
        %p318 = pneg %p128
        %s319 = smul.u32 2, %s30
        %p320 = scmp.lt.s32.totalorder %s319, 3
        %s321 = scalar_select %p320, %s319, 3
        %s322 = scalar_lea.vmem %s4, %s321
        %p323 = pneg %p157
        %p324 = pneg %p154
        %p325 = pneg %p187
        %p326 = pneg %p184
        %s327 = sand.u32 %s174, 1
        %s328 = scalar_lea.sflag [#allocation7], %s327
        %s329 = sand.u32 %s174, 1
        %s330 = smul.addr %s329, 256
        %s331 = scalar_lea.vmem [#allocation11], %s330
        %s332 = smul.u32 16, %s28
        %s333 = smul.u32 2, %s30
        %s334 = smul.u32 2, %s30
        %p335 = scmp.lt.s32.totalorder %s334, 3
        %s336 = scalar_select %p335, %s334, 3
        %s337 = scalar_lea.vmem %s4, %s336
        %s338 = smul.u32 2, %s30
        %s339 = smul.u32 %s29, %s30
        %s340 = smul.u32 16, %s28
        %s341 = smul.u32 2, %s339
        %p343 = scmp.eq.s32.totalorder %s29, 0
        %p344 = scmp.eq.s32.totalorder %s30, 0
        %p345 = pnand %p343, %p344
        %p346 = pneg %p345
        // Predicated region
        $region53: #{tpu_custom_call.1} parent=39 // pred_check
          _
        $region54: #{tpu_custom_call.1} parent=39 // pred_check_branch
          %348 = sbr.rel (%p345) target = $region56
        $region55: #{tpu_custom_call.1} parent=39 // pred_region
          %v349 = vld [vmem:[%s283] sm:$0xf]
          %v350 = vld [vmem:[%s283 + $0x4] sm:$0xf]
          %v351 = vld [vmem:[%s283 + $0x8] sm:$0xf]
          %v352 = vld [vmem:[%s283 + $0xc] sm:$0xf]
          %v353 = vld [vmem:[%s283 + $0x10] sm:$0xf]
          %v354 = vld [vmem:[%s283 + $0x14] sm:$0xf]
          %v355 = vld [vmem:[%s283 + $0x18] sm:$0xf]
          %v356 = vld [vmem:[%s283 + $0x1c] sm:$0xf]
          %v357 = vld [vmem:[%s283 + $0x20] sm:$0xf]
          %v358 = vld [vmem:[%s283 + $0x24] sm:$0xf]
          %v359 = vld [vmem:[%s283 + $0x28] sm:$0xf]
          %v360 = vld [vmem:[%s283 + $0x2c] sm:$0xf]
          %v361 = vld [vmem:[%s283 + $0x30] sm:$0xf]
          %v362 = vld [vmem:[%s283 + $0x34] sm:$0xf]
          %v363 = vld [vmem:[%s283 + $0x38] sm:$0xf]
          %v364 = vld [vmem:[%s283 + $0x3c] sm:$0xf]
          %v365 = vld [vmem:[#allocation8] sm:$0xf]
          %v366 = vld [vmem:[#allocation8 + $0x4] sm:$0xf]
          %v367 = vld [vmem:[#allocation8 + $0x8] sm:$0xf]
          %v368 = vld [vmem:[#allocation8 + $0xc] sm:$0xf]
          %v369 = vld [vmem:[#allocation8 + $0x10] sm:$0xf]
          %v370 = vld [vmem:[#allocation8 + $0x14] sm:$0xf]
          %v371 = vld [vmem:[#allocation8 + $0x18] sm:$0xf]
          %v372 = vld [vmem:[#allocation8 + $0x1c] sm:$0xf]
          %v373 = vld [vmem:[#allocation8 + $0x20] sm:$0xf]
          %v374 = vld [vmem:[#allocation8 + $0x24] sm:$0xf]
          %v375 = vld [vmem:[#allocation8 + $0x28] sm:$0xf]
          %v376 = vld [vmem:[#allocation8 + $0x2c] sm:$0xf]
          %v377 = vld [vmem:[#allocation8 + $0x30] sm:$0xf]
          %v378 = vld [vmem:[#allocation8 + $0x34] sm:$0xf]
          %v379 = vld [vmem:[#allocation8 + $0x38] sm:$0xf]
          %v380 = vld [vmem:[#allocation8 + $0x3c] sm:$0xf]
          %v381 = vld [vmem:[%s2] sm:$0x1]
          %v383 = vlaneseq
          %v384 = vshrl.u32 %v383, 7
          %v385 = vsub.s32 0, %v384
          %v386 = vrot.slane %v381, %v385
          %v404 = vunpack.c.l.b16 %v349
          %v405 = vunpack.c.l.b16 %v350
          %v406 = vunpack.c.l.b16 %v351
          %v407 = vunpack.c.l.b16 %v352
          %v408 = vunpack.c.l.b16 %v353
          %v409 = vunpack.c.l.b16 %v354
          %v410 = vunpack.c.l.b16 %v355
          %v411 = vunpack.c.l.b16 %v356
          %v412 = vunpack.c.l.b16 %v357
          %v413 = vunpack.c.l.b16 %v358
          %v414 = vunpack.c.l.b16 %v359
          %v415 = vunpack.c.l.b16 %v360
          %v416 = vunpack.c.l.b16 %v361
          %v417 = vunpack.c.l.b16 %v362
          %v418 = vunpack.c.l.b16 %v363
          %v419 = vunpack.c.l.b16 %v364
          %v420 = vpack.c.b16 %v405, %v404
          %v421 = vpack.c.b16 %v407, %v406
          %v422 = vpack.c.b16 %v409, %v408
          %v423 = vpack.c.b16 %v411, %v410
          %v424 = vpack.c.b16 %v413, %v412
          %v425 = vpack.c.b16 %v415, %v414
          %v426 = vpack.c.b16 %v417, %v416
          %v427 = vpack.c.b16 %v419, %v418
          %v452 = vunpack.c.l.b16 %v365
          %v453 = vunpack.c.l.b16 %v366
          %v454 = vunpack.c.l.b16 %v367
          %v455 = vunpack.c.l.b16 %v368
          %v456 = vunpack.c.l.b16 %v369
          %v457 = vunpack.c.l.b16 %v370
          %v458 = vunpack.c.l.b16 %v371
          %v459 = vunpack.c.l.b16 %v372
          %v460 = vunpack.c.l.b16 %v373
          %v461 = vunpack.c.l.b16 %v374
          %v462 = vunpack.c.l.b16 %v375
          %v463 = vunpack.c.l.b16 %v376
          %v464 = vunpack.c.l.b16 %v377
          %v465 = vunpack.c.l.b16 %v378
          %v466 = vunpack.c.l.b16 %v379
          %v467 = vunpack.c.l.b16 %v380
          %v468 = vpack.c.b16 %v453, %v452
          %v469 = vpack.c.b16 %v455, %v454
          %v470 = vpack.c.b16 %v457, %v456
          %v471 = vpack.c.b16 %v459, %v458
          %v472 = vpack.c.b16 %v461, %v460
          %v473 = vpack.c.b16 %v463, %v462
          %v474 = vpack.c.b16 %v465, %v464
          %v475 = vpack.c.b16 %v467, %v466
          %484 = vmatprep.subr.bf16.mxu0 0
          %485 = vmatpush1.bf16.msra.mxu0 %v468
          %486 = vmatprep.subr.bf16.mxu0 0
          %487 = vmatpush1.bf16.msra.mxu0 %v469
          %488 = vmatprep.subr.bf16.mxu0 0
          %489 = vmatpush1.bf16.msra.mxu0 %v470
          %490 = vmatprep.subr.bf16.mxu0 0
          %491 = vmatpush1.bf16.msra.mxu0 %v471
          %492 = vmatprep.subr.bf16.mxu0 0
          %493 = vmatpush1.bf16.msra.mxu0 %v472
          %494 = vmatprep.subr.bf16.mxu0 0
          %495 = vmatpush1.bf16.msra.mxu0 %v473
          %496 = vmatprep.subr.bf16.mxu0 0
          %497 = vmatpush1.bf16.msra.mxu0 %v474
          %498 = vmatprep.subr.bf16.mxu0 0
          %499 = vmatpush1.bf16.msra.mxu0 %v475
          %500 = vmatprep.subr.bf16.mxu0 0
          %501 = vmatpush1.bf16.msra.mxu0 0
          %502 = vmatprep.subr.bf16.mxu0 0
          %503 = vmatpush1.bf16.msra.mxu0 0
          %504 = vmatprep.subr.bf16.mxu0 0
          %505 = vmatpush1.bf16.msra.mxu0 0
          %506 = vmatprep.subr.bf16.mxu0 0
          %507 = vmatpush1.bf16.msra.mxu0 0
          %508 = vmatprep.subr.bf16.mxu0 0
          %509 = vmatpush1.bf16.msra.mxu0 0
          %510 = vmatprep.subr.bf16.mxu0 0
          %511 = vmatpush1.bf16.msra.mxu0 0
          %512 = vmatprep.subr.bf16.mxu0 0
          %513 = vmatpush1.bf16.msra.mxu0 0
          %514 = vmatprep.subr.bf16.mxu0 0
          %515 = vmatpush1.bf16.msra.mxu0 0
          %516 = vmatprep.mubr.bf16.mxu0 0
          %517 = vmatmul.mubr.bf16.gmra.mrb[0].mxu0 %v420
          %v518 = vpop.f32.mrb[0].mxu0
          %v519 = vadd.f32 %v386, %v518
          %v520 = vpop.f32.mrb[0].mxu0
          %v521 = vpop.f32.mrb[0].mxu0
          %v522 = vadd.f32 %v386, %v521
          %v523 = vpop.f32.mrb[0].mxu0
          %524 = vmatprep.mubr.bf16.mxu0 0
          %525 = vmatmul.mubr.bf16.gmra.mrb[0].mxu0 %v421
          %v526 = vpop.f32.mrb[0].mxu0
          %v527 = vadd.f32 %v386, %v526
          %v528 = vpop.f32.mrb[0].mxu0
          %v529 = vpop.f32.mrb[0].mxu0
          %v530 = vadd.f32 %v386, %v529
          %v531 = vpop.f32.mrb[0].mxu0
          %532 = vmatprep.mubr.bf16.mxu0 0
          %533 = vmatmul.mubr.bf16.gmra.mrb[0].mxu0 %v422
          %v534 = vpop.f32.mrb[0].mxu0
          %v535 = vadd.f32 %v386, %v534
          %v536 = vpop.f32.mrb[0].mxu0
          %v537 = vpop.f32.mrb[0].mxu0
          %v538 = vadd.f32 %v386, %v537
          %v539 = vpop.f32.mrb[0].mxu0
          %540 = vmatprep.mubr.bf16.mxu0 0
          %541 = vmatmul.mubr.bf16.gmra.mrb[0].mxu0 %v423
          %v542 = vpop.f32.mrb[0].mxu0
          %v543 = vadd.f32 %v386, %v542
          %v544 = vpop.f32.mrb[0].mxu0
          %v545 = vpop.f32.mrb[0].mxu0
          %v546 = vadd.f32 %v386, %v545
          %v547 = vpop.f32.mrb[0].mxu0
          %548 = vmatprep.mubr.bf16.mxu0 0
          %549 = vmatmul.mubr.bf16.gmra.mrb[0].mxu0 %v424
          %v550 = vpop.f32.mrb[0].mxu0
          %v551 = vadd.f32 %v386, %v550
          %v552 = vpop.f32.mrb[0].mxu0
          %v553 = vpop.f32.mrb[0].mxu0
          %v554 = vadd.f32 %v386, %v553
          %v555 = vpop.f32.mrb[0].mxu0
          %556 = vmatprep.mubr.bf16.mxu0 0
          %557 = vmatmul.mubr.bf16.gmra.mrb[0].mxu0 %v425
          %v558 = vpop.f32.mrb[0].mxu0
          %v559 = vadd.f32 %v386, %v558
          %v560 = vpop.f32.mrb[0].mxu0
          %v561 = vpop.f32.mrb[0].mxu0
          %v562 = vadd.f32 %v386, %v561
          %v563 = vpop.f32.mrb[0].mxu0
          %564 = vmatprep.mubr.bf16.mxu0 0
          %565 = vmatmul.mubr.bf16.gmra.mrb[0].mxu0 %v426
          %v566 = vpop.f32.mrb[0].mxu0
          %v567 = vadd.f32 %v386, %v566
          %v568 = vpop.f32.mrb[0].mxu0
          %v569 = vpop.f32.mrb[0].mxu0
          %v570 = vadd.f32 %v386, %v569
          %v571 = vpop.f32.mrb[0].mxu0
          %572 = vmatprep.mubr.bf16.mxu0 0
          %573 = vmatmul.mubr.bf16.gmra.mrb[0].mxu0 %v427
          %v574 = vpop.f32.mrb[0].mxu0
          %v575 = vadd.f32 %v386, %v574
          %v576 = vpop.f32.mrb[0].mxu0
          %v577 = vpop.f32.mrb[0].mxu0
          %v578 = vadd.f32 %v386, %v577
          %v579 = vpop.f32.mrb[0].mxu0
          %580 = vdwg.mxu0
          %v581 = vmax.f32 %v519, 0.0
          %v582 = vmax.f32 %v522, 0.0
          %v583 = vmax.f32 %v527, 0.0
          %v584 = vmax.f32 %v530, 0.0
          %v585 = vmax.f32 %v535, 0.0
          %v586 = vmax.f32 %v538, 0.0
          %v587 = vmax.f32 %v543, 0.0
          %v588 = vmax.f32 %v546, 0.0
          %v589 = vmax.f32 %v551, 0.0
          %v590 = vmax.f32 %v554, 0.0
          %v591 = vmax.f32 %v559, 0.0
          %v592 = vmax.f32 %v562, 0.0
          %v593 = vmax.f32 %v567, 0.0
          %v594 = vmax.f32 %v570, 0.0
          %v595 = vmax.f32 %v575, 0.0
          %v596 = vmax.f32 %v578, 0.0
          %597 = vst [vmem:[#allocation2] sm:$0xff] %v581
          %598 = vst [vmem:[#allocation2 + $0x8] sm:$0xff] %v582
          %599 = vst [vmem:[#allocation2 + $0x10] sm:$0xff] %v583
          %600 = vst [vmem:[#allocation2 + $0x18] sm:$0xff] %v584
          %601 = vst [vmem:[#allocation2 + $0x20] sm:$0xff] %v585
          %602 = vst [vmem:[#allocation2 + $0x28] sm:$0xff] %v586
          %603 = vst [vmem:[#allocation2 + $0x30] sm:$0xff] %v587
          %604 = vst [vmem:[#allocation2 + $0x38] sm:$0xff] %v588
          %605 = vst [vmem:[#allocation2 + $0x40] sm:$0xff] %v589
          %606 = vst [vmem:[#allocation2 + $0x48] sm:$0xff] %v590
          %607 = vst [vmem:[#allocation2 + $0x50] sm:$0xff] %v591
          %608 = vst [vmem:[#allocation2 + $0x58] sm:$0xff] %v592
          %609 = vst [vmem:[#allocation2 + $0x60] sm:$0xff] %v593
          %610 = vst [vmem:[#allocation2 + $0x68] sm:$0xff] %v594
          %611 = vst [vmem:[#allocation2 + $0x70] sm:$0xff] %v595
          %612 = vst [vmem:[#allocation2 + $0x78] sm:$0xff] %v596
          %vm613 = vcmask 7168
          %614 = vst.msk [vmem:[#allocation3] sm:$0xff] %vm613, -inf
          %615 = vst.msk [vmem:[#allocation3 + $0x8] sm:$0xff] %vm613, -inf
          %616 = vst.msk [vmem:[#allocation3 + $0x10] sm:$0xff] %vm613, -inf
          %617 = vst.msk [vmem:[#allocation3 + $0x18] sm:$0xff] %vm613, -inf
          %618 = vst.msk [vmem:[#allocation3 + $0x20] sm:$0xff] %vm613, -inf
          %619 = vst.msk [vmem:[#allocation3 + $0x28] sm:$0xff] %vm613, -inf
          %620 = vst.msk [vmem:[#allocation3 + $0x30] sm:$0xff] %vm613, -inf
          %621 = vst.msk [vmem:[#allocation3 + $0x38] sm:$0xff] %vm613, -inf
          %622 = vst.msk [vmem:[#allocation3 + $0x40] sm:$0xff] %vm613, -inf
          %623 = vst.msk [vmem:[#allocation3 + $0x48] sm:$0xff] %vm613, -inf
          %624 = vst.msk [vmem:[#allocation3 + $0x50] sm:$0xff] %vm613, -inf
          %625 = vst.msk [vmem:[#allocation3 + $0x58] sm:$0xff] %vm613, -inf
          %626 = vst.msk [vmem:[#allocation3 + $0x60] sm:$0xff] %vm613, -inf
          %627 = vst.msk [vmem:[#allocation3 + $0x68] sm:$0xff] %vm613, -inf
          %628 = vst.msk [vmem:[#allocation3 + $0x70] sm:$0xff] %vm613, -inf
          %629 = vst.msk [vmem:[#allocation3 + $0x78] sm:$0xff] %vm613, -inf
          %630 = vst.msk [vmem:[#allocation4] sm:$0xff] %vm613, 0.0
          %631 = vst.msk [vmem:[#allocation4 + $0x8] sm:$0xff] %vm613, 0.0
          %632 = vst.msk [vmem:[#allocation4 + $0x10] sm:$0xff] %vm613, 0.0
          %633 = vst.msk [vmem:[#allocation4 + $0x18] sm:$0xff] %vm613, 0.0
          %634 = vst.msk [vmem:[#allocation4 + $0x20] sm:$0xff] %vm613, 0.0
          %635 = vst.msk [vmem:[#allocation4 + $0x28] sm:$0xff] %vm613, 0.0
          %636 = vst.msk [vmem:[#allocation4 + $0x30] sm:$0xff] %vm613, 0.0
          %637 = vst.msk [vmem:[#allocation4 + $0x38] sm:$0xff] %vm613, 0.0
          %638 = vst.msk [vmem:[#allocation4 + $0x40] sm:$0xff] %vm613, 0.0
          %639 = vst.msk [vmem:[#allocation4 + $0x48] sm:$0xff] %vm613, 0.0
          %640 = vst.msk [vmem:[#allocation4 + $0x50] sm:$0xff] %vm613, 0.0
          %641 = vst.msk [vmem:[#allocation4 + $0x58] sm:$0xff] %vm613, 0.0
          %642 = vst.msk [vmem:[#allocation4 + $0x60] sm:$0xff] %vm613, 0.0
          %643 = vst.msk [vmem:[#allocation4 + $0x68] sm:$0xff] %vm613, 0.0
          %644 = vst.msk [vmem:[#allocation4 + $0x70] sm:$0xff] %vm613, 0.0
          %645 = vst.msk [vmem:[#allocation4 + $0x78] sm:$0xff] %vm613, 0.0
        $region56: #{tpu_custom_call.1} parent=39 // pred_fallthru
          _
        %v646 = vld [vmem:[#allocation2] sm:$0xff]
        %v647 = vld [vmem:[#allocation2 + $0x8] sm:$0xff]
        %v648 = vld [vmem:[#allocation2 + $0x10] sm:$0xff]
        %v649 = vld [vmem:[#allocation2 + $0x18] sm:$0xff]
        %v650 = vld [vmem:[#allocation2 + $0x20] sm:$0xff]
        %v651 = vld [vmem:[#allocation2 + $0x28] sm:$0xff]
        %v652 = vld [vmem:[#allocation2 + $0x30] sm:$0xff]
        %v653 = vld [vmem:[#allocation2 + $0x38] sm:$0xff]
        %v654 = vld [vmem:[#allocation2 + $0x40] sm:$0xff]
        %v655 = vld [vmem:[#allocation2 + $0x48] sm:$0xff]
        %v656 = vld [vmem:[#allocation2 + $0x50] sm:$0xff]
        %v657 = vld [vmem:[#allocation2 + $0x58] sm:$0xff]
        %v658 = vld [vmem:[#allocation2 + $0x60] sm:$0xff]
        %v659 = vld [vmem:[#allocation2 + $0x68] sm:$0xff]
        %v660 = vld [vmem:[#allocation2 + $0x70] sm:$0xff]
        %v661 = vld [vmem:[#allocation2 + $0x78] sm:$0xff]
        %v662 = vpack.c.bf16 %v647, %v646
        %v663 = vpack.c.bf16 %v649, %v648
        %v664 = vpack.c.bf16 %v651, %v650
        %v665 = vpack.c.bf16 %v653, %v652
        %v666 = vpack.c.bf16 %v655, %v654
        %v667 = vpack.c.bf16 %v657, %v656
        %v668 = vpack.c.bf16 %v659, %v658
        %v669 = vpack.c.bf16 %v661, %v660
        %v670 = vld [vmem:[%s296] sm:$0xff]
        %v671 = vld [vmem:[%s296 + $0x8] sm:$0xff]
        %v672 = vld [vmem:[%s296 + $0x10] sm:$0xff]
        %v673 = vld [vmem:[%s296 + $0x18] sm:$0xff]
        %v674 = vld [vmem:[%s296 + $0x20] sm:$0xff]
        %v675 = vld [vmem:[%s296 + $0x28] sm:$0xff]
        %v676 = vld [vmem:[%s296 + $0x30] sm:$0xff]
        %v677 = vld [vmem:[%s296 + $0x38] sm:$0xff]
        %v678 = vld [vmem:[%s296 + $0x40] sm:$0xff]
        %v679 = vld [vmem:[%s296 + $0x48] sm:$0xff]
        %v680 = vld [vmem:[%s296 + $0x50] sm:$0xff]
        %v681 = vld [vmem:[%s296 + $0x58] sm:$0xff]
        %v682 = vld [vmem:[%s296 + $0x60] sm:$0xff]
        %v683 = vld [vmem:[%s296 + $0x68] sm:$0xff]
        %v684 = vld [vmem:[%s296 + $0x70] sm:$0xff]
        %v685 = vld [vmem:[%s296 + $0x78] sm:$0xff]
        %v686 = vld [vmem:[%s337] sm:$0x3]
        %v688 = vlaneseq
        %v689 = vshrl.u32 %v688, 7
        %v690 = vsub.s32 0, %v689
        %v691 = vrot.slane %v686, %v690
        %v692 = vlaneseq
        %v693 = vshrl.u32 %v692, 7
        %v694 = vsub.s32 1, %v693
        %v695 = vrot.slane %v686, %v694
        %v714 = vunpack.c.l.b16 %v670
        %v715 = vunpack.c.h.b16 %v670
        %v716 = vunpack.c.l.b16 %v671
        %v717 = vunpack.c.h.b16 %v671
        %v718 = vunpack.c.l.b16 %v672
        %v719 = vunpack.c.h.b16 %v672
        %v720 = vunpack.c.l.b16 %v673
        %v721 = vunpack.c.h.b16 %v673
        %v722 = vunpack.c.l.b16 %v674
        %v723 = vunpack.c.h.b16 %v674
        %v724 = vunpack.c.l.b16 %v675
        %v725 = vunpack.c.h.b16 %v675
        %v726 = vunpack.c.l.b16 %v676
        %v727 = vunpack.c.h.b16 %v676
        %v728 = vunpack.c.l.b16 %v677
        %v729 = vunpack.c.h.b16 %v677
        %v730 = vunpack.c.l.b16 %v678
        %v731 = vunpack.c.h.b16 %v678
        %v732 = vunpack.c.l.b16 %v679
        %v733 = vunpack.c.h.b16 %v679
        %v734 = vunpack.c.l.b16 %v680
        %v735 = vunpack.c.h.b16 %v680
        %v736 = vunpack.c.l.b16 %v681
        %v737 = vunpack.c.h.b16 %v681
        %v738 = vunpack.c.l.b16 %v682
        %v739 = vunpack.c.h.b16 %v682
        %v740 = vunpack.c.l.b16 %v683
        %v741 = vunpack.c.h.b16 %v683
        %v742 = vunpack.c.l.b16 %v684
        %v743 = vunpack.c.h.b16 %v684
        %v744 = vunpack.c.l.b16 %v685
        %v745 = vunpack.c.h.b16 %v685
        %v746 = vpack.c.b16 %v716, %v714
        %v747 = vpack.c.b16 %v717, %v715
        %v748 = vpack.c.b16 %v720, %v718
        %v749 = vpack.c.b16 %v721, %v719
        %v750 = vpack.c.b16 %v724, %v722
        %v751 = vpack.c.b16 %v725, %v723
        %v752 = vpack.c.b16 %v728, %v726
        %v753 = vpack.c.b16 %v729, %v727
        %v754 = vpack.c.b16 %v732, %v730
        %v755 = vpack.c.b16 %v733, %v731
        %v756 = vpack.c.b16 %v736, %v734
        %v757 = vpack.c.b16 %v737, %v735
        %v758 = vpack.c.b16 %v740, %v738
        %v759 = vpack.c.b16 %v741, %v739
        %v760 = vpack.c.b16 %v744, %v742
        %v761 = vpack.c.b16 %v745, %v743
        %778 = vmatprep.subr.bf16.mxu0 %v747
        %779 = vmatpush1.bf16.msra.mxu0 %v746
        %780 = vmatprep.subr.bf16.mxu0 %v749
        %781 = vmatpush1.bf16.msra.mxu0 %v748
        %782 = vmatprep.subr.bf16.mxu0 %v751
        %783 = vmatpush1.bf16.msra.mxu0 %v750
        %784 = vmatprep.subr.bf16.mxu0 %v753
        %785 = vmatpush1.bf16.msra.mxu0 %v752
        %786 = vmatprep.subr.bf16.mxu0 %v755
        %787 = vmatpush1.bf16.msra.mxu0 %v754
        %788 = vmatprep.subr.bf16.mxu0 %v757
        %789 = vmatpush1.bf16.msra.mxu0 %v756
        %790 = vmatprep.subr.bf16.mxu0 %v759
        %791 = vmatpush1.bf16.msra.mxu0 %v758
        %792 = vmatprep.subr.bf16.mxu0 %v761
        %793 = vmatpush1.bf16.msra.mxu0 %v760
        %794 = vmatprep.subr.bf16.mxu0 0
        %795 = vmatpush1.bf16.msra.mxu0 0
        %796 = vmatprep.subr.bf16.mxu0 0
        %797 = vmatpush1.bf16.msra.mxu0 0
        %798 = vmatprep.subr.bf16.mxu0 0
        %799 = vmatpush1.bf16.msra.mxu0 0
        %800 = vmatprep.subr.bf16.mxu0 0
        %801 = vmatpush1.bf16.msra.mxu0 0
        %802 = vmatprep.subr.bf16.mxu0 0
        %803 = vmatpush1.bf16.msra.mxu0 0
        %804 = vmatprep.subr.bf16.mxu0 0
        %805 = vmatpush1.bf16.msra.mxu0 0
        %806 = vmatprep.subr.bf16.mxu0 0
        %807 = vmatpush1.bf16.msra.mxu0 0
        %808 = vmatprep.subr.bf16.mxu0 0
        %809 = vmatpush1.bf16.msra.mxu0 0
        %810 = vmatprep.mubr.bf16.mxu0 0
        %811 = vmatmul.mubr.bf16.gmra.mrb[0].mxu0 %v662
        %v812 = vpop.f32.mrb[0].mxu0
        %v813 = vadd.f32 %v691, %v812
        %v814 = vpop.f32.mrb[0].mxu0
        %v815 = vadd.f32 %v695, %v814
        %v816 = vpop.f32.mrb[0].mxu0
        %v817 = vadd.f32 %v691, %v816
        %v818 = vpop.f32.mrb[0].mxu0
        %v819 = vadd.f32 %v695, %v818
        %820 = vmatprep.mubr.bf16.mxu0 0
        %821 = vmatmul.mubr.bf16.gmra.mrb[0].mxu0 %v663
        %v822 = vpop.f32.mrb[0].mxu0
        %v823 = vadd.f32 %v691, %v822
        %v824 = vpop.f32.mrb[0].mxu0
        %v825 = vadd.f32 %v695, %v824
        %v826 = vpop.f32.mrb[0].mxu0
        %v827 = vadd.f32 %v691, %v826
        %v828 = vpop.f32.mrb[0].mxu0
        %v829 = vadd.f32 %v695, %v828
        %830 = vmatprep.mubr.bf16.mxu0 0
        %831 = vmatmul.mubr.bf16.gmra.mrb[0].mxu0 %v664
        %v832 = vpop.f32.mrb[0].mxu0
        %v833 = vadd.f32 %v691, %v832
        %v834 = vpop.f32.mrb[0].mxu0
        %v835 = vadd.f32 %v695, %v834
        %v836 = vpop.f32.mrb[0].mxu0
        %v837 = vadd.f32 %v691, %v836
        %v838 = vpop.f32.mrb[0].mxu0
        %v839 = vadd.f32 %v695, %v838
        %840 = vmatprep.mubr.bf16.mxu0 0
        %841 = vmatmul.mubr.bf16.gmra.mrb[0].mxu0 %v665
        %v842 = vpop.f32.mrb[0].mxu0
        %v843 = vadd.f32 %v691, %v842
        %v844 = vpop.f32.mrb[0].mxu0
        %v845 = vadd.f32 %v695, %v844
        %v846 = vpop.f32.mrb[0].mxu0
        %v847 = vadd.f32 %v691, %v846
        %v848 = vpop.f32.mrb[0].mxu0
        %v849 = vadd.f32 %v695, %v848
        %850 = vmatprep.mubr.bf16.mxu0 0
        %851 = vmatmul.mubr.bf16.gmra.mrb[0].mxu0 %v666
        %v852 = vpop.f32.mrb[0].mxu0
        %v853 = vadd.f32 %v691, %v852
        %v854 = vpop.f32.mrb[0].mxu0
        %v855 = vadd.f32 %v695, %v854
        %v856 = vpop.f32.mrb[0].mxu0
        %v857 = vadd.f32 %v691, %v856
        %v858 = vpop.f32.mrb[0].mxu0
        %v859 = vadd.f32 %v695, %v858
        %860 = vmatprep.mubr.bf16.mxu0 0
        %861 = vmatmul.mubr.bf16.gmra.mrb[0].mxu0 %v667
        %v862 = vpop.f32.mrb[0].mxu0
        %v863 = vadd.f32 %v691, %v862
        %v864 = vpop.f32.mrb[0].mxu0
        %v865 = vadd.f32 %v695, %v864
        %v866 = vpop.f32.mrb[0].mxu0
        %v867 = vadd.f32 %v691, %v866
        %v868 = vpop.f32.mrb[0].mxu0
        %v869 = vadd.f32 %v695, %v868
        %870 = vmatprep.mubr.bf16.mxu0 0
        %871 = vmatmul.mubr.bf16.gmra.mrb[0].mxu0 %v668
        %v872 = vpop.f32.mrb[0].mxu0
        %v873 = vadd.f32 %v691, %v872
        %v874 = vpop.f32.mrb[0].mxu0
        %v875 = vadd.f32 %v695, %v874
        %v876 = vpop.f32.mrb[0].mxu0
        %v877 = vadd.f32 %v691, %v876
        %v878 = vpop.f32.mrb[0].mxu0
        %v879 = vadd.f32 %v695, %v878
        %880 = vmatprep.mubr.bf16.mxu0 0
        %881 = vmatmul.mubr.bf16.gmra.mrb[0].mxu0 %v669
        %v882 = vpop.f32.mrb[0].mxu0
        %v883 = vadd.f32 %v691, %v882
        %v884 = vpop.f32.mrb[0].mxu0
        %v885 = vadd.f32 %v695, %v884
        %v886 = vpop.f32.mrb[0].mxu0
        %v887 = vadd.f32 %v691, %v886
        %v888 = vpop.f32.mrb[0].mxu0
        %v889 = vadd.f32 %v695, %v888
        %890 = vdwg.mxu0
        // Predicated region
        $region57: #{tpu_custom_call.1} parent=39 // pred_check
          %p891 = pneg %p343
        $region58: #{tpu_custom_call.1} parent=39 // pred_check_branch
          %893 = sbr.rel (%p891) target = $region60
        $region59: #{tpu_custom_call.1} parent=39 // pred_region
          %v894 = vld [vmem:[#allocation3] sm:$0xff]
          %v895 = vld [vmem:[#allocation3 + $0x8] sm:$0xff]
          %v896 = vld [vmem:[#allocation3 + $0x10] sm:$0xff]
          %v897 = vld [vmem:[#allocation3 + $0x18] sm:$0xff]
          %v898 = vld [vmem:[#allocation3 + $0x20] sm:$0xff]
          %v899 = vld [vmem:[#allocation3 + $0x28] sm:$0xff]
          %v900 = vld [vmem:[#allocation3 + $0x30] sm:$0xff]
          %v901 = vld [vmem:[#allocation3 + $0x38] sm:$0xff]
          %v902 = vld [vmem:[#allocation3 + $0x40] sm:$0xff]
          %v903 = vld [vmem:[#allocation3 + $0x48] sm:$0xff]
          %v904 = vld [vmem:[#allocation3 + $0x50] sm:$0xff]
          %v905 = vld [vmem:[#allocation3 + $0x58] sm:$0xff]
          %v906 = vld [vmem:[#allocation3 + $0x60] sm:$0xff]
          %v907 = vld [vmem:[#allocation3 + $0x68] sm:$0xff]
          %v908 = vld [vmem:[#allocation3 + $0x70] sm:$0xff]
          %v909 = vld [vmem:[#allocation3 + $0x78] sm:$0xff]
          %v910 = vmax.f32 %v813, %v815
          %911 = vmax.xlane.f32.xlu0 %v910
          %v912 = vpop.xlane.xlu0 %911
          %v913 = vmax.f32 %v817, %v819
          %914 = vmax.xlane.f32.xlu0 %v913
          %v915 = vpop.xlane.xlu0 %914
          %v916 = vmax.f32 %v823, %v825
          %917 = vmax.xlane.f32.xlu0 %v916
          %v918 = vpop.xlane.xlu0 %917
          %v919 = vmax.f32 %v827, %v829
          %920 = vmax.xlane.f32.xlu0 %v919
          %v921 = vpop.xlane.xlu0 %920
          %v922 = vmax.f32 %v833, %v835
          %923 = vmax.xlane.f32.xlu0 %v922
          %v924 = vpop.xlane.xlu0 %923
          %v925 = vmax.f32 %v837, %v839
          %926 = vmax.xlane.f32.xlu0 %v925
          %v927 = vpop.xlane.xlu0 %926
          %v928 = vmax.f32 %v843, %v845
          %929 = vmax.xlane.f32.xlu0 %v928
          %v930 = vpop.xlane.xlu0 %929
          %v931 = vmax.f32 %v847, %v849
          %932 = vmax.xlane.f32.xlu0 %v931
          %v933 = vpop.xlane.xlu0 %932
          %v934 = vmax.f32 %v853, %v855
          %935 = vmax.xlane.f32.xlu0 %v934
          %v936 = vpop.xlane.xlu0 %935
          %v937 = vmax.f32 %v857, %v859
          %938 = vmax.xlane.f32.xlu0 %v937
          %v939 = vpop.xlane.xlu0 %938
          %v940 = vmax.f32 %v863, %v865
          %941 = vmax.xlane.f32.xlu0 %v940
          %v942 = vpop.xlane.xlu0 %941
          %v943 = vmax.f32 %v867, %v869
          %944 = vmax.xlane.f32.xlu0 %v943
          %v945 = vpop.xlane.xlu0 %944
          %v946 = vmax.f32 %v873, %v875
          %947 = vmax.xlane.f32.xlu0 %v946
          %v948 = vpop.xlane.xlu0 %947
          %v949 = vmax.f32 %v877, %v879
          %950 = vmax.xlane.f32.xlu0 %v949
          %v951 = vpop.xlane.xlu0 %950
          %v952 = vmax.f32 %v883, %v885
          %953 = vmax.xlane.f32.xlu0 %v952
          %v954 = vpop.xlane.xlu0 %953
          %v955 = vmax.f32 %v887, %v889
          %956 = vmax.xlane.f32.xlu0 %v955
          %v957 = vpop.xlane.xlu0 %956
          %v958 = vmax.f32 %v894, %v912
          %v959 = vmax.f32 %v895, %v915
          %v960 = vmax.f32 %v896, %v918
          %v961 = vmax.f32 %v897, %v921
          %v962 = vmax.f32 %v898, %v924
          %v963 = vmax.f32 %v899, %v927
          %v964 = vmax.f32 %v900, %v930
          %v965 = vmax.f32 %v901, %v933
          %v966 = vmax.f32 %v902, %v936
          %v967 = vmax.f32 %v903, %v939
          %v968 = vmax.f32 %v904, %v942
          %v969 = vmax.f32 %v905, %v945
          %v970 = vmax.f32 %v906, %v948
          %v971 = vmax.f32 %v907, %v951
          %v972 = vmax.f32 %v908, %v954
          %v973 = vmax.f32 %v909, %v957
          %v974 = vld [vmem:[#allocation4] sm:$0xff]
          %v975 = vld [vmem:[#allocation4 + $0x8] sm:$0xff]
          %v976 = vld [vmem:[#allocation4 + $0x10] sm:$0xff]
          %v977 = vld [vmem:[#allocation4 + $0x18] sm:$0xff]
          %v978 = vld [vmem:[#allocation4 + $0x20] sm:$0xff]
          %v979 = vld [vmem:[#allocation4 + $0x28] sm:$0xff]
          %v980 = vld [vmem:[#allocation4 + $0x30] sm:$0xff]
          %v981 = vld [vmem:[#allocation4 + $0x38] sm:$0xff]
          %v982 = vld [vmem:[#allocation4 + $0x40] sm:$0xff]
          %v983 = vld [vmem:[#allocation4 + $0x48] sm:$0xff]
          %v984 = vld [vmem:[#allocation4 + $0x50] sm:$0xff]
          %v985 = vld [vmem:[#allocation4 + $0x58] sm:$0xff]
          %v986 = vld [vmem:[#allocation4 + $0x60] sm:$0xff]
          %v987 = vld [vmem:[#allocation4 + $0x68] sm:$0xff]
          %v988 = vld [vmem:[#allocation4 + $0x70] sm:$0xff]
          %v989 = vld [vmem:[#allocation4 + $0x78] sm:$0xff]
          %v990 = vsub.f32 %v894, %v958
          %v991 = vsub.f32 %v895, %v959
          %v992 = vsub.f32 %v896, %v960
          %v993 = vsub.f32 %v897, %v961
          %v994 = vsub.f32 %v898, %v962
          %v995 = vsub.f32 %v899, %v963
          %v996 = vsub.f32 %v900, %v964
          %v997 = vsub.f32 %v901, %v965
          %v998 = vsub.f32 %v902, %v966
          %v999 = vsub.f32 %v903, %v967
          %v1000 = vsub.f32 %v904, %v968
          %v1001 = vsub.f32 %v905, %v969
          %v1002 = vsub.f32 %v906, %v970
          %v1003 = vsub.f32 %v907, %v971
          %v1004 = vsub.f32 %v908, %v972
          %v1005 = vsub.f32 %v909, %v973
          %v1006 = vmul.f32 %v990, 1.442695
          %v1007 = vpow.pop %v1006
          %v1008 = vmul.f32 %v991, 1.442695
          %v1009 = vpow.pop %v1008
          %v1010 = vmul.f32 %v992, 1.442695
          %v1011 = vpow.pop %v1010
          %v1012 = vmul.f32 %v993, 1.442695
          %v1013 = vpow.pop %v1012
          %v1014 = vmul.f32 %v994, 1.442695
          %v1015 = vpow.pop %v1014
          %v1016 = vmul.f32 %v995, 1.442695
          %v1017 = vpow.pop %v1016
          %v1018 = vmul.f32 %v996, 1.442695
          %v1019 = vpow.pop %v1018
          %v1020 = vmul.f32 %v997, 1.442695
          %v1021 = vpow.pop %v1020
          %v1022 = vmul.f32 %v998, 1.442695
          %v1023 = vpow.pop %v1022
          %v1024 = vmul.f32 %v999, 1.442695
          %v1025 = vpow.pop %v1024
          %v1026 = vmul.f32 %v1000, 1.442695
          %v1027 = vpow.pop %v1026
          %v1028 = vmul.f32 %v1001, 1.442695
          %v1029 = vpow.pop %v1028
          %v1030 = vmul.f32 %v1002, 1.442695
          %v1031 = vpow.pop %v1030
          %v1032 = vmul.f32 %v1003, 1.442695
          %v1033 = vpow.pop %v1032
          %v1034 = vmul.f32 %v1004, 1.442695
          %v1035 = vpow.pop %v1034
          %v1036 = vmul.f32 %v1005, 1.442695
          %v1037 = vpow.pop %v1036
          %v1038 = vmul.f32 %v974, %v1007
          %v1039 = vmul.f32 %v975, %v1009
          %v1040 = vmul.f32 %v976, %v1011
          %v1041 = vmul.f32 %v977, %v1013
          %v1042 = vmul.f32 %v978, %v1015
          %v1043 = vmul.f32 %v979, %v1017
          %v1044 = vmul.f32 %v980, %v1019
          %v1045 = vmul.f32 %v981, %v1021
          %v1046 = vmul.f32 %v982, %v1023
          %v1047 = vmul.f32 %v983, %v1025
          %v1048 = vmul.f32 %v984, %v1027
          %v1049 = vmul.f32 %v985, %v1029
          %v1050 = vmul.f32 %v986, %v1031
          %v1051 = vmul.f32 %v987, %v1033
          %v1052 = vmul.f32 %v988, %v1035
          %v1053 = vmul.f32 %v989, %v1037
          %1055 = vset.pattern.permute.xlu0 0
          %1056 = vperm.xlu0 %1055, %v958
          %v1057 = vpop.permute.xlu0 %1056
          %1060 = vset.pattern.permute.xlu0 0
          %1061 = vperm.xlu0 %1060, %v959
          %v1062 = vpop.permute.xlu0 %1061
          %1065 = vset.pattern.permute.xlu0 0
          %1066 = vperm.xlu0 %1065, %v960
          %v1067 = vpop.permute.xlu0 %1066
          %1070 = vset.pattern.permute.xlu0 0
          %1071 = vperm.xlu0 %1070, %v961
          %v1072 = vpop.permute.xlu0 %1071
          %1075 = vset.pattern.permute.xlu0 0
          %1076 = vperm.xlu0 %1075, %v962
          %v1077 = vpop.permute.xlu0 %1076
          %1080 = vset.pattern.permute.xlu0 0
          %1081 = vperm.xlu0 %1080, %v963
          %v1082 = vpop.permute.xlu0 %1081
          %1085 = vset.pattern.permute.xlu0 0
          %1086 = vperm.xlu0 %1085, %v964
          %v1087 = vpop.permute.xlu0 %1086
          %1090 = vset.pattern.permute.xlu0 0
          %1091 = vperm.xlu0 %1090, %v965
          %v1092 = vpop.permute.xlu0 %1091
          %1095 = vset.pattern.permute.xlu0 0
          %1096 = vperm.xlu0 %1095, %v966
          %v1097 = vpop.permute.xlu0 %1096
          %1100 = vset.pattern.permute.xlu0 0
          %1101 = vperm.xlu0 %1100, %v967
          %v1102 = vpop.permute.xlu0 %1101
          %1105 = vset.pattern.permute.xlu0 0
          %1106 = vperm.xlu0 %1105, %v968
          %v1107 = vpop.permute.xlu0 %1106
          %1110 = vset.pattern.permute.xlu0 0
          %1111 = vperm.xlu0 %1110, %v969
          %v1112 = vpop.permute.xlu0 %1111
          %1115 = vset.pattern.permute.xlu0 0
          %1116 = vperm.xlu0 %1115, %v970
          %v1117 = vpop.permute.xlu0 %1116
          %1120 = vset.pattern.permute.xlu0 0
          %1121 = vperm.xlu0 %1120, %v971
          %v1122 = vpop.permute.xlu0 %1121
          %1125 = vset.pattern.permute.xlu0 0
          %1126 = vperm.xlu0 %1125, %v972
          %v1127 = vpop.permute.xlu0 %1126
          %1130 = vset.pattern.permute.xlu0 0
          %1131 = vperm.xlu0 %1130, %v973
          %v1132 = vpop.permute.xlu0 %1131
          %v1134 = vsub.f32 %v813, %v1057
          %v1135 = vsub.f32 %v815, %v1057
          %v1136 = vsub.f32 %v817, %v1062
          %v1137 = vsub.f32 %v819, %v1062
          %v1138 = vsub.f32 %v823, %v1067
          %v1139 = vsub.f32 %v825, %v1067
          %v1140 = vsub.f32 %v827, %v1072
          %v1141 = vsub.f32 %v829, %v1072
          %v1142 = vsub.f32 %v833, %v1077
          %v1143 = vsub.f32 %v835, %v1077
          %v1144 = vsub.f32 %v837, %v1082
          %v1145 = vsub.f32 %v839, %v1082
          %v1146 = vsub.f32 %v843, %v1087
          %v1147 = vsub.f32 %v845, %v1087
          %v1148 = vsub.f32 %v847, %v1092
          %v1149 = vsub.f32 %v849, %v1092
          %v1150 = vsub.f32 %v853, %v1097
          %v1151 = vsub.f32 %v855, %v1097
          %v1152 = vsub.f32 %v857, %v1102
          %v1153 = vsub.f32 %v859, %v1102
          %v1154 = vsub.f32 %v863, %v1107
          %v1155 = vsub.f32 %v865, %v1107
          %v1156 = vsub.f32 %v867, %v1112
          %v1157 = vsub.f32 %v869, %v1112
          %v1158 = vsub.f32 %v873, %v1117
          %v1159 = vsub.f32 %v875, %v1117
          %v1160 = vsub.f32 %v877, %v1122
          %v1161 = vsub.f32 %v879, %v1122
          %v1162 = vsub.f32 %v883, %v1127
          %v1163 = vsub.f32 %v885, %v1127
          %v1164 = vsub.f32 %v887, %v1132
          %v1165 = vsub.f32 %v889, %v1132
          %v1166 = vmul.f32 %v1134, 1.442695
          %v1167 = vpow.pop %v1166
          %v1168 = vmul.f32 %v1135, 1.442695
          %v1169 = vpow.pop %v1168
          %v1170 = vmul.f32 %v1136, 1.442695
          %v1171 = vpow.pop %v1170
          %v1172 = vmul.f32 %v1137, 1.442695
          %v1173 = vpow.pop %v1172
          %v1174 = vmul.f32 %v1138, 1.442695
          %v1175 = vpow.pop %v1174
          %v1176 = vmul.f32 %v1139, 1.442695
          %v1177 = vpow.pop %v1176
          %v1178 = vmul.f32 %v1140, 1.442695
          %v1179 = vpow.pop %v1178
          %v1180 = vmul.f32 %v1141, 1.442695
          %v1181 = vpow.pop %v1180
          %v1182 = vmul.f32 %v1142, 1.442695
          %v1183 = vpow.pop %v1182
          %v1184 = vmul.f32 %v1143, 1.442695
          %v1185 = vpow.pop %v1184
          %v1186 = vmul.f32 %v1144, 1.442695
          %v1187 = vpow.pop %v1186
          %v1188 = vmul.f32 %v1145, 1.442695
          %v1189 = vpow.pop %v1188
          %v1190 = vmul.f32 %v1146, 1.442695
          %v1191 = vpow.pop %v1190
          %v1192 = vmul.f32 %v1147, 1.442695
          %v1193 = vpow.pop %v1192
          %v1194 = vmul.f32 %v1148, 1.442695
          %v1195 = vpow.pop %v1194
          %v1196 = vmul.f32 %v1149, 1.442695
          %v1197 = vpow.pop %v1196
          %v1198 = vmul.f32 %v1150, 1.442695
          %v1199 = vpow.pop %v1198
          %v1200 = vmul.f32 %v1151, 1.442695
          %v1201 = vpow.pop %v1200
          %v1202 = vmul.f32 %v1152, 1.442695
          %v1203 = vpow.pop %v1202
          %v1204 = vmul.f32 %v1153, 1.442695
          %v1205 = vpow.pop %v1204
          %v1206 = vmul.f32 %v1154, 1.442695
          %v1207 = vpow.pop %v1206
          %v1208 = vmul.f32 %v1155, 1.442695
          %v1209 = vpow.pop %v1208
          %v1210 = vmul.f32 %v1156, 1.442695
          %v1211 = vpow.pop %v1210
          %v1212 = vmul.f32 %v1157, 1.442695
          %v1213 = vpow.pop %v1212
          %v1214 = vmul.f32 %v1158, 1.442695
          %v1215 = vpow.pop %v1214
          %v1216 = vmul.f32 %v1159, 1.442695
          %v1217 = vpow.pop %v1216
          %v1218 = vmul.f32 %v1160, 1.442695
          %v1219 = vpow.pop %v1218
          %v1220 = vmul.f32 %v1161, 1.442695
          %v1221 = vpow.pop %v1220
          %v1222 = vmul.f32 %v1162, 1.442695
          %v1223 = vpow.pop %v1222
          %v1224 = vmul.f32 %v1163, 1.442695
          %v1225 = vpow.pop %v1224
          %v1226 = vmul.f32 %v1164, 1.442695
          %v1227 = vpow.pop %v1226
          %v1228 = vmul.f32 %v1165, 1.442695
          %v1229 = vpow.pop %v1228
          %v1230 = vadd.f32 %v1167, %v1169
          %1231 = vadd.xlane.f32.xlu0 %v1230
          %v1232 = vpop.xlane.xlu0 %1231
          %v1233 = vadd.f32 %v1171, %v1173
          %1234 = vadd.xlane.f32.xlu0 %v1233
          %v1235 = vpop.xlane.xlu0 %1234
          %v1236 = vadd.f32 %v1175, %v1177
          %1237 = vadd.xlane.f32.xlu0 %v1236
          %v1238 = vpop.xlane.xlu0 %1237
          %v1239 = vadd.f32 %v1179, %v1181
          %1240 = vadd.xlane.f32.xlu0 %v1239
          %v1241 = vpop.xlane.xlu0 %1240
          %v1242 = vadd.f32 %v1183, %v1185
          %1243 = vadd.xlane.f32.xlu0 %v1242
          %v1244 = vpop.xlane.xlu0 %1243
          %v1245 = vadd.f32 %v1187, %v1189
          %1246 = vadd.xlane.f32.xlu0 %v1245
          %v1247 = vpop.xlane.xlu0 %1246
          %v1248 = vadd.f32 %v1191, %v1193
          %1249 = vadd.xlane.f32.xlu0 %v1248
          %v1250 = vpop.xlane.xlu0 %1249
          %v1251 = vadd.f32 %v1195, %v1197
          %1252 = vadd.xlane.f32.xlu0 %v1251
          %v1253 = vpop.xlane.xlu0 %1252
          %v1254 = vadd.f32 %v1199, %v1201
          %1255 = vadd.xlane.f32.xlu0 %v1254
          %v1256 = vpop.xlane.xlu0 %1255
          %v1257 = vadd.f32 %v1203, %v1205
          %1258 = vadd.xlane.f32.xlu0 %v1257
          %v1259 = vpop.xlane.xlu0 %1258
          %v1260 = vadd.f32 %v1207, %v1209
          %1261 = vadd.xlane.f32.xlu0 %v1260
          %v1262 = vpop.xlane.xlu0 %1261
          %v1263 = vadd.f32 %v1211, %v1213
          %1264 = vadd.xlane.f32.xlu0 %v1263
          %v1265 = vpop.xlane.xlu0 %1264
          %v1266 = vadd.f32 %v1215, %v1217
          %1267 = vadd.xlane.f32.xlu0 %v1266
          %v1268 = vpop.xlane.xlu0 %1267
          %v1269 = vadd.f32 %v1219, %v1221
          %1270 = vadd.xlane.f32.xlu0 %v1269
          %v1271 = vpop.xlane.xlu0 %1270
          %v1272 = vadd.f32 %v1223, %v1225
          %1273 = vadd.xlane.f32.xlu0 %v1272
          %v1274 = vpop.xlane.xlu0 %1273
          %v1275 = vadd.f32 %v1227, %v1229
          %1276 = vadd.xlane.f32.xlu0 %v1275
          %v1277 = vpop.xlane.xlu0 %1276
          %v1278 = vadd.f32 %v1038, %v1232
          %v1279 = vadd.f32 %v1039, %v1235
          %v1280 = vadd.f32 %v1040, %v1238
          %v1281 = vadd.f32 %v1041, %v1241
          %v1282 = vadd.f32 %v1042, %v1244
          %v1283 = vadd.f32 %v1043, %v1247
          %v1284 = vadd.f32 %v1044, %v1250
          %v1285 = vadd.f32 %v1045, %v1253
          %v1286 = vadd.f32 %v1046, %v1256
          %v1287 = vadd.f32 %v1047, %v1259
          %v1288 = vadd.f32 %v1048, %v1262
          %v1289 = vadd.f32 %v1049, %v1265
          %v1290 = vadd.f32 %v1050, %v1268
          %v1291 = vadd.f32 %v1051, %v1271
          %v1292 = vadd.f32 %v1052, %v1274
          %v1293 = vadd.f32 %v1053, %v1277
          %vm1294 = vcmask 7168
          %1295 = vst.msk [vmem:[#allocation4] sm:$0xff] %vm1294, %v1278
          %1296 = vst.msk [vmem:[#allocation4 + $0x8] sm:$0xff] %vm1294, %v1279
          %1297 = vst.msk [vmem:[#allocation4 + $0x10] sm:$0xff] %vm1294, %v1280
          %1298 = vst.msk [vmem:[#allocation4 + $0x18] sm:$0xff] %vm1294, %v1281
          %1299 = vst.msk [vmem:[#allocation4 + $0x20] sm:$0xff] %vm1294, %v1282
          %1300 = vst.msk [vmem:[#allocation4 + $0x28] sm:$0xff] %vm1294, %v1283
          %1301 = vst.msk [vmem:[#allocation4 + $0x30] sm:$0xff] %vm1294, %v1284
          %1302 = vst.msk [vmem:[#allocation4 + $0x38] sm:$0xff] %vm1294, %v1285
          %1303 = vst.msk [vmem:[#allocation4 + $0x40] sm:$0xff] %vm1294, %v1286
          %1304 = vst.msk [vmem:[#allocation4 + $0x48] sm:$0xff] %vm1294, %v1287
          %1305 = vst.msk [vmem:[#allocation4 + $0x50] sm:$0xff] %vm1294, %v1288
          %1306 = vst.msk [vmem:[#allocation4 + $0x58] sm:$0xff] %vm1294, %v1289
          %1307 = vst.msk [vmem:[#allocation4 + $0x60] sm:$0xff] %vm1294, %v1290
          %1308 = vst.msk [vmem:[#allocation4 + $0x68] sm:$0xff] %vm1294, %v1291
          %1309 = vst.msk [vmem:[#allocation4 + $0x70] sm:$0xff] %vm1294, %v1292
          %1310 = vst.msk [vmem:[#allocation4 + $0x78] sm:$0xff] %vm1294, %v1293
          %1311 = vst.msk [vmem:[#allocation3] sm:$0xff] %vm1294, %v958
          %1312 = vst.msk [vmem:[#allocation3 + $0x8] sm:$0xff] %vm1294, %v959
          %1313 = vst.msk [vmem:[#allocation3 + $0x10] sm:$0xff] %vm1294, %v960
          %1314 = vst.msk [vmem:[#allocation3 + $0x18] sm:$0xff] %vm1294, %v961
          %1315 = vst.msk [vmem:[#allocation3 + $0x20] sm:$0xff] %vm1294, %v962
          %1316 = vst.msk [vmem:[#allocation3 + $0x28] sm:$0xff] %vm1294, %v963
          %1317 = vst.msk [vmem:[#allocation3 + $0x30] sm:$0xff] %vm1294, %v964
          %1318 = vst.msk [vmem:[#allocation3 + $0x38] sm:$0xff] %vm1294, %v965
          %1319 = vst.msk [vmem:[#allocation3 + $0x40] sm:$0xff] %vm1294, %v966
          %1320 = vst.msk [vmem:[#allocation3 + $0x48] sm:$0xff] %vm1294, %v967
          %1321 = vst.msk [vmem:[#allocation3 + $0x50] sm:$0xff] %vm1294, %v968
          %1322 = vst.msk [vmem:[#allocation3 + $0x58] sm:$0xff] %vm1294, %v969
          %1323 = vst.msk [vmem:[#allocation3 + $0x60] sm:$0xff] %vm1294, %v970
          %1324 = vst.msk [vmem:[#allocation3 + $0x68] sm:$0xff] %vm1294, %v971
          %1325 = vst.msk [vmem:[#allocation3 + $0x70] sm:$0xff] %vm1294, %v972
          %1326 = vst.msk [vmem:[#allocation3 + $0x78] sm:$0xff] %vm1294, %v973
        $region60: #{tpu_custom_call.1} parent=39 // pred_fallthru
          _
        %p1327 = scmp.eq.s32.totalorder %s29, 1
        // Predicated region
        $region61: #{tpu_custom_call.1} parent=39 // pred_check
          %p1328 = pneg %p1327
        $region62: #{tpu_custom_call.1} parent=39 // pred_check_branch
          %1330 = sbr.rel (%p1328) target = $region64
        $region63: #{tpu_custom_call.1} parent=39 // pred_region
          %v1331 = vld [vmem:[#allocation3] sm:$0xff]
          %v1332 = vld [vmem:[#allocation3 + $0x8] sm:$0xff]
          %v1333 = vld [vmem:[#allocation3 + $0x10] sm:$0xff]
          %v1334 = vld [vmem:[#allocation3 + $0x18] sm:$0xff]
          %v1335 = vld [vmem:[#allocation3 + $0x20] sm:$0xff]
          %v1336 = vld [vmem:[#allocation3 + $0x28] sm:$0xff]
          %v1337 = vld [vmem:[#allocation3 + $0x30] sm:$0xff]
          %v1338 = vld [vmem:[#allocation3 + $0x38] sm:$0xff]
          %v1339 = vld [vmem:[#allocation3 + $0x40] sm:$0xff]
          %v1340 = vld [vmem:[#allocation3 + $0x48] sm:$0xff]
          %v1341 = vld [vmem:[#allocation3 + $0x50] sm:$0xff]
          %v1342 = vld [vmem:[#allocation3 + $0x58] sm:$0xff]
          %v1343 = vld [vmem:[#allocation3 + $0x60] sm:$0xff]
          %v1344 = vld [vmem:[#allocation3 + $0x68] sm:$0xff]
          %v1345 = vld [vmem:[#allocation3 + $0x70] sm:$0xff]
          %v1346 = vld [vmem:[#allocation3 + $0x78] sm:$0xff]
          %v1347 = vld [vmem:[#allocation4] sm:$0xff]
          %v1348 = vld [vmem:[#allocation4 + $0x8] sm:$0xff]
          %v1349 = vld [vmem:[#allocation4 + $0x10] sm:$0xff]
          %v1350 = vld [vmem:[#allocation4 + $0x18] sm:$0xff]
          %v1351 = vld [vmem:[#allocation4 + $0x20] sm:$0xff]
          %v1352 = vld [vmem:[#allocation4 + $0x28] sm:$0xff]
          %v1353 = vld [vmem:[#allocation4 + $0x30] sm:$0xff]
          %v1354 = vld [vmem:[#allocation4 + $0x38] sm:$0xff]
          %v1355 = vld [vmem:[#allocation4 + $0x40] sm:$0xff]
          %v1356 = vld [vmem:[#allocation4 + $0x48] sm:$0xff]
          %v1357 = vld [vmem:[#allocation4 + $0x50] sm:$0xff]
          %v1358 = vld [vmem:[#allocation4 + $0x58] sm:$0xff]
          %v1359 = vld [vmem:[#allocation4 + $0x60] sm:$0xff]
          %v1360 = vld [vmem:[#allocation4 + $0x68] sm:$0xff]
          %v1361 = vld [vmem:[#allocation4 + $0x70] sm:$0xff]
          %v1362 = vld [vmem:[#allocation4 + $0x78] sm:$0xff]
          %v1363 = vlog2.pop %v1347
          %v1364 = vmul.f32 %v1363, 0.6931472
          %v1365 = vlog2.pop %v1348
          %v1366 = vmul.f32 %v1365, 0.6931472
          %v1367 = vlog2.pop %v1349
          %v1368 = vmul.f32 %v1367, 0.6931472
          %v1369 = vlog2.pop %v1350
          %v1370 = vmul.f32 %v1369, 0.6931472
          %v1371 = vlog2.pop %v1351
          %v1372 = vmul.f32 %v1371, 0.6931472
          %v1373 = vlog2.pop %v1352
          %v1374 = vmul.f32 %v1373, 0.6931472
          %v1375 = vlog2.pop %v1353
          %v1376 = vmul.f32 %v1375, 0.6931472
          %v1377 = vlog2.pop %v1354
          %v1378 = vmul.f32 %v1377, 0.6931472
          %v1379 = vlog2.pop %v1355
          %v1380 = vmul.f32 %v1379, 0.6931472
          %v1381 = vlog2.pop %v1356
          %v1382 = vmul.f32 %v1381, 0.6931472
          %v1383 = vlog2.pop %v1357
          %v1384 = vmul.f32 %v1383, 0.6931472
          %v1385 = vlog2.pop %v1358
          %v1386 = vmul.f32 %v1385, 0.6931472
          %v1387 = vlog2.pop %v1359
          %v1388 = vmul.f32 %v1387, 0.6931472
          %v1389 = vlog2.pop %v1360
          %v1390 = vmul.f32 %v1389, 0.6931472
          %v1391 = vlog2.pop %v1361
          %v1392 = vmul.f32 %v1391, 0.6931472
          %v1393 = vlog2.pop %v1362
          %v1394 = vmul.f32 %v1393, 0.6931472
          %v1395 = vadd.f32 %v1331, %v1364
          %v1396 = vadd.f32 %v1332, %v1366
          %v1397 = vadd.f32 %v1333, %v1368
          %v1398 = vadd.f32 %v1334, %v1370
          %v1399 = vadd.f32 %v1335, %v1372
          %v1400 = vadd.f32 %v1336, %v1374
          %v1401 = vadd.f32 %v1337, %v1376
          %v1402 = vadd.f32 %v1338, %v1378
          %v1403 = vadd.f32 %v1339, %v1380
          %v1404 = vadd.f32 %v1340, %v1382
          %v1405 = vadd.f32 %v1341, %v1384
          %v1406 = vadd.f32 %v1342, %v1386
          %v1407 = vadd.f32 %v1343, %v1388
          %v1408 = vadd.f32 %v1344, %v1390
          %v1409 = vadd.f32 %v1345, %v1392
          %v1410 = vadd.f32 %v1346, %v1394
          %1412 = vset.pattern.permute.xlu0 0
          %1413 = vperm.xlu0 %1412, %v1395
          %v1414 = vpop.permute.xlu0 %1413
          %1417 = vset.pattern.permute.xlu0 0
          %1418 = vperm.xlu0 %1417, %v1396
          %v1419 = vpop.permute.xlu0 %1418
          %1422 = vset.pattern.permute.xlu0 0
          %1423 = vperm.xlu0 %1422, %v1397
          %v1424 = vpop.permute.xlu0 %1423
          %1427 = vset.pattern.permute.xlu0 0
          %1428 = vperm.xlu0 %1427, %v1398
          %v1429 = vpop.permute.xlu0 %1428
          %1432 = vset.pattern.permute.xlu0 0
          %1433 = vperm.xlu0 %1432, %v1399
          %v1434 = vpop.permute.xlu0 %1433
          %1437 = vset.pattern.permute.xlu0 0
          %1438 = vperm.xlu0 %1437, %v1400
          %v1439 = vpop.permute.xlu0 %1438
          %1442 = vset.pattern.permute.xlu0 0
          %1443 = vperm.xlu0 %1442, %v1401
          %v1444 = vpop.permute.xlu0 %1443
          %1447 = vset.pattern.permute.xlu0 0
          %1448 = vperm.xlu0 %1447, %v1402
          %v1449 = vpop.permute.xlu0 %1448
          %1452 = vset.pattern.permute.xlu0 0
          %1453 = vperm.xlu0 %1452, %v1403
          %v1454 = vpop.permute.xlu0 %1453
          %1457 = vset.pattern.permute.xlu0 0
          %1458 = vperm.xlu0 %1457, %v1404
          %v1459 = vpop.permute.xlu0 %1458
          %1462 = vset.pattern.permute.xlu0 0
          %1463 = vperm.xlu0 %1462, %v1405
          %v1464 = vpop.permute.xlu0 %1463
          %1467 = vset.pattern.permute.xlu0 0
          %1468 = vperm.xlu0 %1467, %v1406
          %v1469 = vpop.permute.xlu0 %1468
          %1472 = vset.pattern.permute.xlu0 0
          %1473 = vperm.xlu0 %1472, %v1407
          %v1474 = vpop.permute.xlu0 %1473
          %1477 = vset.pattern.permute.xlu0 0
          %1478 = vperm.xlu0 %1477, %v1408
          %v1479 = vpop.permute.xlu0 %1478
          %1482 = vset.pattern.permute.xlu0 0
          %1483 = vperm.xlu0 %1482, %v1409
          %v1484 = vpop.permute.xlu0 %1483
          %1487 = vset.pattern.permute.xlu0 0
          %1488 = vperm.xlu0 %1487, %v1410
          %v1489 = vpop.permute.xlu0 %1488
          %v1491 = vsub.f32 %v813, %v1414
          %v1492 = vsub.f32 %v815, %v1414
          %v1493 = vsub.f32 %v817, %v1419
          %v1494 = vsub.f32 %v819, %v1419
          %v1495 = vsub.f32 %v823, %v1424
          %v1496 = vsub.f32 %v825, %v1424
          %v1497 = vsub.f32 %v827, %v1429
          %v1498 = vsub.f32 %v829, %v1429
          %v1499 = vsub.f32 %v833, %v1434
          %v1500 = vsub.f32 %v835, %v1434
          %v1501 = vsub.f32 %v837, %v1439
          %v1502 = vsub.f32 %v839, %v1439
          %v1503 = vsub.f32 %v843, %v1444
          %v1504 = vsub.f32 %v845, %v1444
          %v1505 = vsub.f32 %v847, %v1449
          %v1506 = vsub.f32 %v849, %v1449
          %v1507 = vsub.f32 %v853, %v1454
          %v1508 = vsub.f32 %v855, %v1454
          %v1509 = vsub.f32 %v857, %v1459
          %v1510 = vsub.f32 %v859, %v1459
          %v1511 = vsub.f32 %v863, %v1464
          %v1512 = vsub.f32 %v865, %v1464
          %v1513 = vsub.f32 %v867, %v1469
          %v1514 = vsub.f32 %v869, %v1469
          %v1515 = vsub.f32 %v873, %v1474
          %v1516 = vsub.f32 %v875, %v1474
          %v1517 = vsub.f32 %v877, %v1479
          %v1518 = vsub.f32 %v879, %v1479
          %v1519 = vsub.f32 %v883, %v1484
          %v1520 = vsub.f32 %v885, %v1484
          %v1521 = vsub.f32 %v887, %v1489
          %v1522 = vsub.f32 %v889, %v1489
          %1523 = vst [vmem:[%s331] sm:$0xff] %v1491
          %1524 = vst [vmem:[%s331 + $0x8] sm:$0xff] %v1492
          %1525 = vst [vmem:[%s331 + $0x10] sm:$0xff] %v1493
          %1526 = vst [vmem:[%s331 + $0x18] sm:$0xff] %v1494
          %1527 = vst [vmem:[%s331 + $0x20] sm:$0xff] %v1495
          %1528 = vst [vmem:[%s331 + $0x28] sm:$0xff] %v1496
          %1529 = vst [vmem:[%s331 + $0x30] sm:$0xff] %v1497
          %1530 = vst [vmem:[%s331 + $0x38] sm:$0xff] %v1498
          %1531 = vst [vmem:[%s331 + $0x40] sm:$0xff] %v1499
          %1532 = vst [vmem:[%s331 + $0x48] sm:$0xff] %v1500
          %1533 = vst [vmem:[%s331 + $0x50] sm:$0xff] %v1501
          %1534 = vst [vmem:[%s331 + $0x58] sm:$0xff] %v1502
          %1535 = vst [vmem:[%s331 + $0x60] sm:$0xff] %v1503
          %1536 = vst [vmem:[%s331 + $0x68] sm:$0xff] %v1504
          %1537 = vst [vmem:[%s331 + $0x70] sm:$0xff] %v1505
          %1538 = vst [vmem:[%s331 + $0x78] sm:$0xff] %v1506
          %1539 = vst [vmem:[%s331 + $0x80] sm:$0xff] %v1507
          %1540 = vst [vmem:[%s331 + $0x88] sm:$0xff] %v1508
          %1541 = vst [vmem:[%s331 + $0x90] sm:$0xff] %v1509
          %1542 = vst [vmem:[%s331 + $0x98] sm:$0xff] %v1510
          %1543 = vst [vmem:[%s331 + $0xa0] sm:$0xff] %v1511
          %1544 = vst [vmem:[%s331 + $0xa8] sm:$0xff] %v1512
          %1545 = vst [vmem:[%s331 + $0xb0] sm:$0xff] %v1513
          %1546 = vst [vmem:[%s331 + $0xb8] sm:$0xff] %v1514
          %1547 = vst [vmem:[%s331 + $0xc0] sm:$0xff] %v1515
          %1548 = vst [vmem:[%s331 + $0xc8] sm:$0xff] %v1516
          %1549 = vst [vmem:[%s331 + $0xd0] sm:$0xff] %v1517
          %1550 = vst [vmem:[%s331 + $0xd8] sm:$0xff] %v1518
          %1551 = vst [vmem:[%s331 + $0xe0] sm:$0xff] %v1519
          %1552 = vst [vmem:[%s331 + $0xe8] sm:$0xff] %v1520
          %1553 = vst [vmem:[%s331 + $0xf0] sm:$0xff] %v1521
          %1554 = vst [vmem:[%s331 + $0xf8] sm:$0xff] %v1522
        $region64: #{tpu_custom_call.1} parent=39 // pred_fallthru
          _
        %s1555 = sand.u32 %s174, 1
        %s1556 = scalar_lea.sflag [#allocation7], %s1555
        %s1557 = sand.u32 %s174, 1
        %s1558 = smul.addr %s1557, 256
        %s1559 = scalar_lea.vmem [#allocation11], %s1558
        // Predicated region
        $region65: #{tpu_custom_call.1} parent=39 // pred_check
          %p1560 = pneg %p184
        $region66: #{tpu_custom_call.1} parent=39 // pred_check_branch
          %1562 = sbr.rel (%p1560) target = $region68
        $region67: #{tpu_custom_call.1} parent=39 // pred_region
          %s1563 = smul.u32 %s29, %s30
          %s1564 = smul.u32 16, %s28
          %s1565 = smul.u32 2, %s1563
          %s1567 = ssub.s32 4096, 4096
          %1568 = vsyncadd %s1556, %s1567
          %s1569 = smul.addr %s1564, 4
          %s1570 = sadd.s32 %s1565, %s1569
          %s1571 = smul.addr %s1570, 128
          %s1572 = scalar_lea.hbm %s5, %s1571
          %s1573 = sshll.u32 %s1559, 4
          %s1574 = int_to_ptr.vmem [resolvable:$true] %s1573
          %1579 = dma.vmem_to_hbm [thread:$0]  %s1574, 4096, %s1572, %s1556, 256, 512, 16
        $region68: #{tpu_custom_call.1} parent=39 // pred_fallthru
          _
      $region40: #{tpu_custom_call.1} parent=5 // pred_fallthru
        _
      %p1580 = scmp.le.s32.totalorder 2, %s18
      // Predicated region
      $region69: #{tpu_custom_call.1} parent=5 // pred_check
        %p1581 = pneg %p1580
      $region70: #{tpu_custom_call.1} parent=5 // pred_check_branch
        %1583 = sbr.rel (%p1581) target = $region72
      $region71: #{tpu_custom_call.1} parent=5 // pred_region
        %s1584 = ssub.s32 %s18, 2
        // Predicated region
        $region73: #{tpu_custom_call.1} parent=71 // pred_check
          %p1585 = pneg %p190
        $region74: #{tpu_custom_call.1} parent=71 // pred_check_branch
          %1587 = sbr.rel (%p1585) target = $region76
        $region75: #{tpu_custom_call.1} parent=71 // pred_region
          %s1588 = sand.u32 %s175, 1
          %s1589 = scalar_lea.sflag [#allocation7], %s1588
          %s1590 = sand.u32 %s175, 1
          %s1591 = smul.addr %s1590, 256
          %s1592 = scalar_lea.vmem [#allocation11], %s1591
          %1593 = dma.done %s1589, 4096
        $region76: #{tpu_custom_call.1} parent=71 // pred_fallthru
          _
      $region72: #{tpu_custom_call.1} parent=5 // pred_fallthru
        _
    $region6: #{tpu_custom_call.1} parent=1 // loop_footer
      %s22 = sadd.s32 1, %s18
    $region7: #{tpu_custom_call.1} parent=1 // loop_footer_branch
      %17 = sbr.rel target = $region3
    $region8: #{tpu_custom_call.1} parent=1 // loop_exit
      _
    %1594 = vsyncpa [#allocation6], 1
    %s1595 = scalar_lea.sflag [#allocation6], 1
    %1596 = vsyncpa %s1595, 1
    %1597 = vsyncpa [#allocation9], 1
    %1598 = vsyncpa [#allocation7], 1
    %s1599 = scalar_lea.sflag [#allocation7], 1
    %1600 = vsyncpa %s1599, 1

</llo_original>
